<compile_context>
chip_gen: v7x
topology: tpu7x:2x2x1
jax: 0.10.0
libtpu: 0.0.40
codegen_flags: <defaults>
</compile_context>

<pallas_src>
import functools

import jax
import jax.numpy as jnp
from jax.experimental import pallas as pl
from jax.experimental.pallas import tpu as pltpu

BN_EPS = 1e-5


def _sigmoid(z):
    # sigmoid(x) == 0.5 * tanh(0.5 * x) + 0.5  -> single EUP op, no VALU divide.
    return 0.5 * jnp.tanh(0.5 * z) + 0.5


# --------------------------------------------------------------------------
# Kernel 1: transform prelude (Linear -> BN -> Sigmoid -> Linear -> BN -> Sigmoid)
# --------------------------------------------------------------------------
def _transform_kernel(x_ref, w1_ref, b1_ref, g1_ref, beta1_ref,
                      w2_ref, b2_ref, g2_ref, beta2_ref, doc_ref):
    x = x_ref[...].astype(jnp.float32)

    # ---- Linear 1 ----
    h1 = jnp.dot(x, w1_ref[...], preferred_element_type=jnp.float32) + b1_ref[...]

    # ---- BatchNorm1d (training mode: batch stats, biased variance) ----
    mean1 = jnp.mean(h1, axis=0, keepdims=True)
    var1 = jnp.mean((h1 - mean1) ** 2, axis=0, keepdims=True)
    h1 = (h1 - mean1) * jax.lax.rsqrt(var1 + BN_EPS) * g1_ref[...] + beta1_ref[...]
    a1 = _sigmoid(h1)

    # ---- Linear 2 ----
    h2 = jnp.dot(a1, w2_ref[...], preferred_element_type=jnp.float32) + b2_ref[...]

    # ---- BatchNorm1d ----
    mean2 = jnp.mean(h2, axis=0, keepdims=True)
    var2 = jnp.mean((h2 - mean2) ** 2, axis=0, keepdims=True)
    h2 = (h2 - mean2) * jax.lax.rsqrt(var2 + BN_EPS) * g2_ref[...] + beta2_ref[...]

    doc_ref[...] = _sigmoid(h2).astype(doc_ref.dtype)


# --------------------------------------------------------------------------
# Kernel 2: decoded = sigmoid(docvec @ word_embedding), gridded over V tiles
# --------------------------------------------------------------------------
def _vocab_matmul_kernel(doc_ref, we_ref, out_ref):
    # bf16 x bf16 -> f32 accumulate on the MXU; sigmoid on f32 logits.
    logits = jnp.dot(doc_ref[...], we_ref[...], preferred_element_type=jnp.float32)
    out_ref[...] = _sigmoid(logits).astype(out_ref.dtype)


# --------------------------------------------------------------------------
# Tile / VMEM budgeting (generation aware)
# --------------------------------------------------------------------------
def _scoped_vmem_cap():
    """Cap scoped VMEM at ~half of physical: 32 MiB on v7x, 48 MiB on v5e/v6e."""
    try:
        phys = int(pltpu.get_tpu_info().vmem_capacity_bytes)
    except Exception:
        phys = 64 * 1024 * 1024  # conservative default (v7x per-TC physical)
    return int(min(phys // 2, 48 * 1024 * 1024))


def _pick_tile_v(V_pad, B, H, requested, cap_bytes):
    """Largest lane-dense (128-multiple) V tile fitting the VMEM budget,
    clamped to `requested` and V_pad, keeping >= 2 grid steps when possible so
    v7x's two TensorCores both get work on the 'parallel' axis."""
    requested = max(128, (requested // 128) * 128)
    slack = 2 * 1024 * 1024
    fixed = 2 * (B * H * 2)                 # docvec (bf16), assume double-buffered
    per_tv = 2 * (H * 2 + B * 4)            # bf16 W_e tile + f32 out tile, x2 buffers
    budget = max(cap_bytes - slack - fixed, per_tv * 128)
    tv = max(128, (budget // per_tv) // 128 * 128)
    tv = min(tv, requested, V_pad)
    if tv >= V_pad and V_pad >= 256:
        tv = ((V_pad // 2 + 127) // 128) * 128   # force >= 2 grid steps
    return int(tv)


# --------------------------------------------------------------------------
# Wrapper
# --------------------------------------------------------------------------
@functools.partial(jax.jit, static_argnames=("tile_v",))
def decoder_wordembed_forward(x, params, *, tile_v=2048):
    B = x.shape[0]
    H, V = params["word_embedding"].shape

    # ---- prelude: docvec [B, H] (bf16 out, saves HBM round-trip bytes) ----
    # TODO(synk): tile the prelude over the D_in / H feature dims if they grow
    # beyond VMEM (BN needs the full batch, so only K/feature dims may be tiled).
    vmem = pl.BlockSpec(memory_space=pltpu.MemorySpace.VMEM)
    docvec = pl.pallas_call(
        _transform_kernel,
        out_shape=jax.ShapeDtypeStruct((B, H), jnp.bfloat16),
        in_specs=[vmem] * 9,
        out_specs=vmem,
    )(x,
      params["w1"], params["b1"], params["gamma1"], params["beta1"],
      params["w2"], params["b2"], params["gamma2"], params["beta2"])

    # ---- main stage: grid over the vocab dimension ----
    # bf16 weights for the HBM-bound matmul (f32 accumulation inside kernel).
    we = params["word_embedding"].astype(jnp.bfloat16)

    # Pad V up to a multiple of 128 so every weight/output tile is lane-dense
    # and stores are unmasked; the padded tail is sliced off afterwards.
    V_pad = ((V + 127) // 128) * 128
    if V_pad != V:
        we = jnp.pad(we, ((0, 0), (0, V_pad - V)))

    cap = _scoped_vmem_cap()
    tv = _pick_tile_v(V_pad, B, H, tile_v, cap)
    grid = (pl.cdiv(V_pad, tv),)

    # VMEM budget: double-buffered W_e tile (bf16) + output tile (f32) +
    # docvec (bf16, counted double-buffered even though its index is invariant),
    # plus slack. Clamped to the generation-aware cap.
    needed = 2 * (H * tv * 2) + 2 * (B * tv * 4) + 2 * (B * H * 2) + (2 << 20)
    vmem_limit = int(min(max(needed, 16 * 1024 * 1024), cap))

    out = pl.pallas_call(
        _vocab_matmul_kernel,
        out_shape=jax.ShapeDtypeStruct((B, V_pad), jnp.float32),
        grid=grid,
        in_specs=[
            pl.BlockSpec((B, H), lambda j: (0, 0)),    # docvec: resident across V tiles
            pl.BlockSpec((H, tv), lambda j: (0, j)),   # word_embedding tile
        ],
        out_specs=pl.BlockSpec((B, tv), lambda j: (0, j)),
        compiler_params=pltpu.CompilerParams(
            dimension_semantics=("parallel",),         # megacore-shard V on v7x
            vmem_limit_bytes=vmem_limit,
        ),
    )(docvec, we)

    if V_pad != V:
        out = out[:, :V]
    return out


# --------------------------------------------------------------------------
# Params / reference
# --------------------------------------------------------------------------
def init_params(key, input_dim, hidden_dim, output_dim):
    """Deterministic synthetic parameter init (matches module shapes)."""
    k_we, k_w1, k_b1, k_w2, k_b2 = jax.random.split(key, 5)
    # nn.Parameter(torch.randn(hidden_dim, output_dim))
    word_embedding = jax.random.normal(k_we, (hidden_dim, output_dim), jnp.float32)
    # nn.Linear weights stored pre-transposed as [in, out]
    w1 = jax.random.normal(k_w1, (input_dim, hidden_dim), jnp.float32) * 0.1
    b1 = jax.random.normal(k_b1, (1, hidden_dim), jnp.float32) * 0.1
    w2 = jax.random.normal(k_w2, (hidden_dim, hidden_dim), jnp.float32) * 0.1
    b2 = jax.random.normal(k_b2, (1, hidden_dim), jnp.float32) * 0.1
    # BatchNorm1d affine params (PyTorch default init: gamma=1, beta=0)
    gamma1 = jnp.ones((1, hidden_dim), jnp.float32)
    beta1 = jnp.zeros((1, hidden_dim), jnp.float32)
    gamma2 = jnp.ones((1, hidden_dim), jnp.float32)
    beta2 = jnp.zeros((1, hidden_dim), jnp.float32)
    return dict(word_embedding=word_embedding,
                w1=w1, b1=b1, gamma1=gamma1, beta1=beta1,
                w2=w2, b2=b2, gamma2=gamma2, beta2=beta2)


def reference_forward(x, p):
    """Pure-JAX f32 reference mirroring the PyTorch forward (training-mode BN)."""
    hp = jax.lax.Precision.HIGHEST
    h1 = jnp.dot(x, p["w1"], precision=hp) + p["b1"]
    m1 = jnp.mean(h1, axis=0, keepdims=True)
    v1 = jnp.mean((h1 - m1) ** 2, axis=0, keepdims=True)
    a1 = jax.nn.sigmoid((h1 - m1) / jnp.sqrt(v1 + BN_EPS) * p["gamma1"] + p["beta1"])
    h2 = jnp.dot(a1, p["w2"], precision=hp) + p["b2"]
    m2 = jnp.mean(h2, axis=0, keepdims=True)
    v2 = jnp.mean((h2 - m2) ** 2, axis=0, keepdims=True)
    docvec = jax.nn.sigmoid((h2 - m2) / jnp.sqrt(v2 + BN_EPS) * p["gamma2"] + p["beta2"])
    return jax.nn.sigmoid(jnp.dot(docvec, p["word_embedding"], precision=hp))


if __name__ == "__main__":
    key = jax.random.PRNGKey(0)
    k_x, k_p, k_p2 = jax.random.split(key, 3)

    # --- main case: hardware-aligned shapes, V a multiple of 128 ---
    B, INPUT_DIM, HIDDEN_DIM, OUTPUT_DIM = 128, 128, 128, 1024
    x = jax.random.normal(k_x, (B, INPUT_DIM), jnp.float32)
    params = init_params(k_p, INPUT_DIM, HIDDEN_DIM, OUTPUT_DIM)

    out = decoder_wordembed_forward(x, params)
    out = jax.block_until_ready(out)
    ref = reference_forward(x, params)
    assert out.shape == (B, OUTPUT_DIM)
    # bf16 weights/docvec in the final matmul -> tolerance relaxed deliberately
    # vs the f32 reference (sigmoid output is in (0,1); error is a few 1e-3).
    assert jnp.allclose(out, ref, atol=2e-2), "mismatch vs reference (aligned V)"

    # --- ragged-V case: exercises the pad-to-128 path ---
    V2 = 1000  # not a multiple of 128
    params2 = init_params(k_p2, INPUT_DIM, HIDDEN_DIM, V2)
    out2 = decoder_wordembed_forward(x, params2)
    out2 = jax.block_until_ready(out2)
    ref2 = reference_forward(x, params2)
    assert out2.shape == (B, V2)
    assert jnp.allclose(out2, ref2, atol=2e-2), "mismatch vs reference (ragged V)"

    print("KERNEL_OK")
</pallas_src>

<mosaic_0001>
module attributes {stable_mosaic.version = 11 : i64} {
  func.func @_vocab_matmul_kernel(%arg0: i32, %arg1: memref<128x128xbf16, #tpu.memory_space<vmem>>, %arg2: memref<128x512xbf16, #tpu.memory_space<vmem>>, %arg3: memref<128x512xf32, #tpu.memory_space<vmem>>) attributes {dimension_semantics = [#tpu.dimension_semantics<parallel>], iteration_bounds = array<i64: 2>, scalar_prefetch = 0 : i64, scratch_operands = 0 : i64, tpu.core_type = #tpu.core_type<tc>, window_params = [{pipeline_mode = #tpu.pipeline_mode<synchronous>, transform_indices = @transform_0, window_bounds = array<i64: 128, 128>}, {transform_indices = @transform_1, window_bounds = array<i64: 128, 512>}, {transform_indices = @transform_2, window_bounds = array<i64: 128, 512>}]} {
    %c0 = arith.constant 0 : index
    %c0_0 = arith.constant 0 : index
    %0 = vector.load %arg1[%c0, %c0_0] : memref<128x128xbf16, #tpu.memory_space<vmem>>, vector<128x128xbf16>
    %c0_1 = arith.constant 0 : index
    %c0_2 = arith.constant 0 : index
    %1 = vector.load %arg2[%c0_1, %c0_2] : memref<128x512xbf16, #tpu.memory_space<vmem>>, vector<128x512xbf16>
    %cst = arith.constant dense<0.000000e+00> : vector<128x512xf32>
    %2 = tpu.matmul %0, %1, %cst {dimension_numbers = #tpu.dot_dimension_numbers<[1], [0], [0], [1], [0, 0, 1, 1], [], []>} : vector<128x128xbf16>, vector<128x512xbf16>, vector<128x512xf32> -> vector<128x512xf32>
    %cst_3 = arith.constant 5.000000e-01 : f32
    %3 = vector.broadcast %cst_3 : f32 to vector<128x512xf32>
    %4 = arith.mulf %3, %2 : vector<128x512xf32>
    %5 = math.tanh %4 : vector<128x512xf32>
    %cst_4 = arith.constant 5.000000e-01 : f32
    %6 = vector.broadcast %cst_4 : f32 to vector<128x512xf32>
    %7 = arith.mulf %6, %5 : vector<128x512xf32>
    %cst_5 = arith.constant 5.000000e-01 : f32
    %8 = vector.broadcast %cst_5 : f32 to vector<128x512xf32>
    %9 = arith.addf %7, %8 : vector<128x512xf32>
    %c0_6 = arith.constant 0 : index
    %c0_7 = arith.constant 0 : index
    %10 = vector.load %arg3[%c0_6, %c0_7] : memref<128x512xf32, #tpu.memory_space<vmem>>, vector<128x512xf32>
    tpu.vector_store %arg3[%c0_6, %c0_7], %9 {strides = array<i32>} : memref<128x512xf32, #tpu.memory_space<vmem>>, vector<128x512xf32>,
    return
  }
  func.func @transform_0(%arg0: i32) -> (i32, i32) {
    %c0_i32 = arith.constant 0 : i32
    %c0_i32_0 = arith.constant 0 : i32
    %c0_i32_1 = arith.constant 0 : i32
    return %c0_i32, %c0_i32_0 : i32, i32
  }
  func.func @transform_1(%arg0: i32) -> (i32, i32) {
    %c0_i32 = arith.constant 0 : i32
    %c0_i32_0 = arith.constant 0 : i32
    return %c0_i32, %arg0 : i32, i32
  }
  func.func @transform_2(%arg0: i32) -> (i32, i32) {
    %c0_i32 = arith.constant 0 : i32
    %c0_i32_0 = arith.constant 0 : i32
    return %c0_i32, %arg0 : i32, i32
  }
}

module attributes {stable_mosaic.version = 11 : i64} {
  func.func @_transform_kernel(%arg0: memref<128x128xf32, #tpu.memory_space<vmem>>, %arg1: memref<128x128xf32, #tpu.memory_space<vmem>>, %arg2: memref<1x128xf32, #tpu.memory_space<vmem>>, %arg3: memref<1x128xf32, #tpu.memory_space<vmem>>, %arg4: memref<1x128xf32, #tpu.memory_space<vmem>>, %arg5: memref<128x128xf32, #tpu.memory_space<vmem>>, %arg6: memref<1x128xf32, #tpu.memory_space<vmem>>, %arg7: memref<1x128xf32, #tpu.memory_space<vmem>>, %arg8: memref<1x128xf32, #tpu.memory_space<vmem>>, %arg9: memref<128x128xbf16, #tpu.memory_space<vmem>>) attributes {dimension_semantics = [], scalar_prefetch = 0 : i64, scratch_operands = 0 : i64, tpu.core_type = #tpu.core_type<tc>} {
    %c0 = arith.constant 0 : index
    %c0_0 = arith.constant 0 : index
    %0 = vector.load %arg0[%c0, %c0_0] : memref<128x128xf32, #tpu.memory_space<vmem>>, vector<128x128xf32>
    %c0_1 = arith.constant 0 : index
    %c0_2 = arith.constant 0 : index
    %1 = vector.load %arg1[%c0_1, %c0_2] : memref<128x128xf32, #tpu.memory_space<vmem>>, vector<128x128xf32>
    %cst = arith.constant dense<0.000000e+00> : vector<128x128xf32>
    %2 = tpu.matmul %0, %1, %cst {dimension_numbers = #tpu.dot_dimension_numbers<[1], [0], [0], [1], [0, 0, 1, 1], [], []>} : vector<128x128xf32>, vector<128x128xf32>, vector<128x128xf32> -> vector<128x128xf32>
    %c0_3 = arith.constant 0 : index
    %c0_4 = arith.constant 0 : index
    %3 = vector.load %arg2[%c0_3, %c0_4] : memref<1x128xf32, #tpu.memory_space<vmem>>, vector<1x128xf32>
    %4 = vector.broadcast %3 : vector<1x128xf32> to vector<128x128xf32>
    %5 = arith.addf %2, %4 : vector<128x128xf32>
    %cst_5 = arith.constant dense<0.000000e+00> : vector<128xf32>
    %6 = vector.multi_reduction <add>, %5, %cst_5 [0] : vector<128x128xf32> to vector<128xf32>
    %7 = vector.shape_cast %6 : vector<128xf32> to vector<1x128xf32>
    %cst_6 = arith.constant 1.280000e+02 : f32
    %8 = vector.broadcast %cst_6 : f32 to vector<1x128xf32>
    %9 = arith.divf %7, %8 : vector<1x128xf32>
    %10 = vector.broadcast %9 : vector<1x128xf32> to vector<128x128xf32>
    %11 = arith.subf %5, %10 : vector<128x128xf32>
    %12 = arith.mulf %11, %11 : vector<128x128xf32>
    %cst_7 = arith.constant dense<0.000000e+00> : vector<128xf32>
    %13 = vector.multi_reduction <add>, %12, %cst_7 [0] : vector<128x128xf32> to vector<128xf32>
    %14 = vector.shape_cast %13 : vector<128xf32> to vector<1x128xf32>
    %cst_8 = arith.constant 1.280000e+02 : f32
    %15 = vector.broadcast %cst_8 : f32 to vector<1x128xf32>
    %16 = arith.divf %14, %15 : vector<1x128xf32>
    %17 = vector.broadcast %9 : vector<1x128xf32> to vector<128x128xf32>
    %18 = arith.subf %5, %17 : vector<128x128xf32>
    %cst_9 = arith.constant 9.99999974E-6 : f32
    %19 = vector.broadcast %cst_9 : f32 to vector<1x128xf32>
    %20 = arith.addf %16, %19 : vector<1x128xf32>
    %21 = math.rsqrt %20 : vector<1x128xf32>
    %22 = vector.broadcast %21 : vector<1x128xf32> to vector<128x128xf32>
    %23 = arith.mulf %18, %22 : vector<128x128xf32>
    %c0_10 = arith.constant 0 : index
    %c0_11 = arith.constant 0 : index
    %24 = vector.load %arg3[%c0_10, %c0_11] : memref<1x128xf32, #tpu.memory_space<vmem>>, vector<1x128xf32>
    %25 = vector.broadcast %24 : vector<1x128xf32> to vector<128x128xf32>
    %26 = arith.mulf %23, %25 : vector<128x128xf32>
    %c0_12 = arith.constant 0 : index
    %c0_13 = arith.constant 0 : index
    %27 = vector.load %arg4[%c0_12, %c0_13] : memref<1x128xf32, #tpu.memory_space<vmem>>, vector<1x128xf32>
    %28 = vector.broadcast %27 : vector<1x128xf32> to vector<128x128xf32>
    %29 = arith.addf %26, %28 : vector<128x128xf32>
    %cst_14 = arith.constant 5.000000e-01 : f32
    %30 = vector.broadcast %cst_14 : f32 to vector<128x128xf32>
    %31 = arith.mulf %30, %29 : vector<128x128xf32>
    %32 = math.tanh %31 : vector<128x128xf32>
    %cst_15 = arith.constant 5.000000e-01 : f32
    %33 = vector.broadcast %cst_15 : f32 to vector<128x128xf32>
    %34 = arith.mulf %33, %32 : vector<128x128xf32>
    %cst_16 = arith.constant 5.000000e-01 : f32
    %35 = vector.broadcast %cst_16 : f32 to vector<128x128xf32>
    %36 = arith.addf %34, %35 : vector<128x128xf32>
    %c0_17 = arith.constant 0 : index
    %c0_18 = arith.constant 0 : index
    %37 = vector.load %arg5[%c0_17, %c0_18] : memref<128x128xf32, #tpu.memory_space<vmem>>, vector<128x128xf32>
    %cst_19 = arith.constant dense<0.000000e+00> : vector<128x128xf32>
    %38 = tpu.matmul %36, %37, %cst_19 {dimension_numbers = #tpu.dot_dimension_numbers<[1], [0], [0], [1], [0, 0, 1, 1], [], []>} : vector<128x128xf32>, vector<128x128xf32>, vector<128x128xf32> -> vector<128x128xf32>
    %c0_20 = arith.constant 0 : index
    %c0_21 = arith.constant 0 : index
    %39 = vector.load %arg6[%c0_20, %c0_21] : memref<1x128xf32, #tpu.memory_space<vmem>>, vector<1x128xf32>
    %40 = vector.broadcast %39 : vector<1x128xf32> to vector<128x128xf32>
    %41 = arith.addf %38, %40 : vector<128x128xf32>
    %cst_22 = arith.constant dense<0.000000e+00> : vector<128xf32>
    %42 = vector.multi_reduction <add>, %41, %cst_22 [0] : vector<128x128xf32> to vector<128xf32>
    %43 = vector.shape_cast %42 : vector<128xf32> to vector<1x128xf32>
    %cst_23 = arith.constant 1.280000e+02 : f32
    %44 = vector.broadcast %cst_23 : f32 to vector<1x128xf32>
    %45 = arith.divf %43, %44 : vector<1x128xf32>
    %46 = vector.broadcast %45 : vector<1x128xf32> to vector<128x128xf32>
    %47 = arith.subf %41, %46 : vector<128x128xf32>
    %48 = arith.mulf %47, %47 : vector<128x128xf32>
    %cst_24 = arith.constant dense<0.000000e+00> : vector<128xf32>
    %49 = vector.multi_reduction <add>, %48, %cst_24 [0] : vector<128x128xf32> to vector<128xf32>
    %50 = vector.shape_cast %49 : vector<128xf32> to vector<1x128xf32>
    %cst_25 = arith.constant 1.280000e+02 : f32
    %51 = vector.broadcast %cst_25 : f32 to vector<1x128xf32>
    %52 = arith.divf %50, %51 : vector<1x128xf32>
    %53 = vector.broadcast %45 : vector<1x128xf32> to vector<128x128xf32>
    %54 = arith.subf %41, %53 : vector<128x128xf32>
    %cst_26 = arith.constant 9.99999974E-6 : f32
    %55 = vector.broadcast %cst_26 : f32 to vector<1x128xf32>
    %56 = arith.addf %52, %55 : vector<1x128xf32>
    %57 = math.rsqrt %56 : vector<1x128xf32>
    %58 = vector.broadcast %57 : vector<1x128xf32> to vector<128x128xf32>
    %59 = arith.mulf %54, %58 : vector<128x128xf32>
    %c0_27 = arith.constant 0 : index
    %c0_28 = arith.constant 0 : index
    %60 = vector.load %arg7[%c0_27, %c0_28] : memref<1x128xf32, #tpu.memory_space<vmem>>, vector<1x128xf32>
    %61 = vector.broadcast %60 : vector<1x128xf32> to vector<128x128xf32>
    %62 = arith.mulf %59, %61 : vector<128x128xf32>
    %c0_29 = arith.constant 0 : index
    %c0_30 = arith.constant 0 : index
    %63 = vector.load %arg8[%c0_29, %c0_30] : memref<1x128xf32, #tpu.memory_space<vmem>>, vector<1x128xf32>
    %64 = vector.broadcast %63 : vector<1x128xf32> to vector<128x128xf32>
    %65 = arith.addf %62, %64 : vector<128x128xf32>
    %cst_31 = arith.constant 5.000000e-01 : f32
    %66 = vector.broadcast %cst_31 : f32 to vector<128x128xf32>
    %67 = arith.mulf %66, %65 : vector<128x128xf32>
    %68 = math.tanh %67 : vector<128x128xf32>
    %cst_32 = arith.constant 5.000000e-01 : f32
    %69 = vector.broadcast %cst_32 : f32 to vector<128x128xf32>
    %70 = arith.mulf %69, %68 : vector<128x128xf32>
    %cst_33 = arith.constant 5.000000e-01 : f32
    %71 = vector.broadcast %cst_33 : f32 to vector<128x128xf32>
    %72 = arith.addf %70, %71 : vector<128x128xf32>
    %73 = arith.truncf %72 : vector<128x128xf32> to vector<128x128xbf16>
    %c0_34 = arith.constant 0 : index
    %c0_35 = arith.constant 0 : index
    %74 = vector.load %arg9[%c0_34, %c0_35] : memref<128x128xbf16, #tpu.memory_space<vmem>>, vector<128x128xbf16>
    tpu.vector_store %arg9[%c0_34, %c0_35], %73 {strides = array<i32>} : memref<128x128xbf16, #tpu.memory_space<vmem>>, vector<128x128xbf16>,
    return
  }
}

</mosaic_0001>

<llo_original>
// kernel: decoder_wordembed_forward.2
$region0: #{decoder_wordembed_forward.2}
  #allocation0 [shape = 'u32[]', space=smem, size = 0x4, offset = 0x4, fixed_abs, tag = 'smem constant byte address 0x4 - core index']
  #allocation1 [shape = 'u32[144,128]{1,0:T(1,128)}', space=vmem, size = 0x12000, scoped, tag = 'internal scratch']
  %s0 = inlined_call_operand.hbm [shape: f32[128,128], index: 0, kind: input, shape index: {}]
  %s1 = inlined_call_operand.hbm [shape: f32[128,128], index: 1, kind: input, shape index: {}]
  %s2 = inlined_call_operand.vmem [shape: f32[1,128], index: 2, kind: input, shape index: {}]
  %s3 = inlined_call_operand.vmem [shape: f32[1,128], index: 3, kind: input, shape index: {}]
  %s4 = inlined_call_operand.vmem [shape: f32[1,128], index: 4, kind: input, shape index: {}]
  %s5 = inlined_call_operand.hbm [shape: f32[128,128], index: 5, kind: input, shape index: {}]
  %s6 = inlined_call_operand.vmem [shape: f32[1,128], index: 6, kind: input, shape index: {}]
  %s7 = inlined_call_operand.vmem [shape: f32[1,128], index: 7, kind: input, shape index: {}]
  %s8 = inlined_call_operand.vmem [shape: f32[1,128], index: 8, kind: input, shape index: {}]
  %s9 = inlined_call_operand.vmem [shape: bf16[128,128], index: 9, kind: output, shape index: {}]
  %s10 = sld [smem:[#allocation0]]
  $region58: #{decoder_wordembed_forward.2} parent=0
    _
  %s12 = ssub.s32 1, %s10
  %s13 = scalar_select 0, %s12, %s10
  $region1: #{decoder_wordembed_forward.2} parent=0
    #allocation2 [shape = 'u8[65536]{0}', space=vmem, size = 0x10000, scoped, tag = 'input window, operand 0, single buffered']
    #allocation3 [shape = 's32[1]{0}', space=sflag, size = 0x4, scoped, tag = 'scoped memory for decoder_wordembed_forward.2']
    #allocation4 [shape = 'u8[65536]{0}', space=vmem, size = 0x10000, scoped, tag = 'input window, operand 1, single buffered']
    #allocation5 [shape = 's32[1]{0}', space=sflag, size = 0x4, scoped, tag = 'scoped memory for decoder_wordembed_forward.2']
    #allocation6 [shape = 'u8[65536]{0}', space=vmem, size = 0x10000, scoped, tag = 'input window, operand 5, single buffered']
    %14 = vsyncpa [#allocation3], 0
    %15 = vsyncpa [#allocation5], 0
    // Predicated region
    $region2: #{decoder_wordembed_forward.2} parent=1 // pred_check
      _
    $region3: #{decoder_wordembed_forward.2} parent=1 // pred_check_branch
      %17 = sbr.rel (0) target = $region5
    $region4: #{decoder_wordembed_forward.2} parent=1 // pred_region
      %s19 = ssub.s32 2048, 2048
      %20 = vsyncadd [#allocation3], %s19
      %s21 = sshll.u32 [#allocation2], 4
      %s22 = int_to_ptr.vmem [resolvable:$true] %s21
      %27 = dma.hbm_to_vmem [thread:$0]  %s0, 2048, %s22, [#allocation3], 128, 128, 8
    $region5: #{decoder_wordembed_forward.2} parent=1 // pred_fallthru
      _
    // Predicated region
    $region6: #{decoder_wordembed_forward.2} parent=1 // pred_check
      _
    $region7: #{decoder_wordembed_forward.2} parent=1 // pred_check_branch
      %29 = sbr.rel (0) target = $region9
    $region8: #{decoder_wordembed_forward.2} parent=1 // pred_region
      %s31 = ssub.s32 2048, 2048
      %32 = vsyncadd [#allocation5], %s31
      %s33 = sshll.u32 [#allocation4], 4
      %s34 = int_to_ptr.vmem [resolvable:$true] %s33
      %39 = dma.hbm_to_vmem [thread:$0]  %s1, 2048, %s34, [#allocation5], 128, 128, 8
    $region9: #{decoder_wordembed_forward.2} parent=1 // pred_fallthru
      _
    // Predicated region
    $region10: #{decoder_wordembed_forward.2} parent=1 // pred_check
      _
    $region11: #{decoder_wordembed_forward.2} parent=1 // pred_check_branch
      %41 = sbr.rel (0) target = $region13
    $region12: #{decoder_wordembed_forward.2} parent=1 // pred_region
      _
    $region13: #{decoder_wordembed_forward.2} parent=1 // pred_fallthru
      _
    // Predicated region
    $region14: #{decoder_wordembed_forward.2} parent=1 // pred_check
      _
    $region15: #{decoder_wordembed_forward.2} parent=1 // pred_check_branch
      %43 = sbr.rel (0) target = $region17
    $region16: #{decoder_wordembed_forward.2} parent=1 // pred_region
      _
    $region17: #{decoder_wordembed_forward.2} parent=1 // pred_fallthru
      _
    // Predicated region
    $region18: #{decoder_wordembed_forward.2} parent=1 // pred_check
      _
    $region19: #{decoder_wordembed_forward.2} parent=1 // pred_check_branch
      %45 = sbr.rel (0) target = $region21
    $region20: #{decoder_wordembed_forward.2} parent=1 // pred_region
      _
    $region21: #{decoder_wordembed_forward.2} parent=1 // pred_fallthru
      _
    // Predicated region
    $region22: #{decoder_wordembed_forward.2} parent=1 // pred_check
      _
    $region23: #{decoder_wordembed_forward.2} parent=1 // pred_check_branch
      %47 = sbr.rel (0) target = $region25
    $region24: #{decoder_wordembed_forward.2} parent=1 // pred_region
      %s49 = ssub.s32 2048, 2048
      %50 = vsyncadd [#allocation5], %s49
      %s51 = sshll.u32 [#allocation6], 4
      %s52 = int_to_ptr.vmem [resolvable:$true] %s51
      %57 = dma.hbm_to_vmem [thread:$0]  %s5, 2048, %s52, [#allocation5], 128, 128, 8
    $region25: #{decoder_wordembed_forward.2} parent=1 // pred_fallthru
      _
    // Predicated region
    $region26: #{decoder_wordembed_forward.2} parent=1 // pred_check
      _
    $region27: #{decoder_wordembed_forward.2} parent=1 // pred_check_branch
      %59 = sbr.rel (0) target = $region29
    $region28: #{decoder_wordembed_forward.2} parent=1 // pred_region
      _
    $region29: #{decoder_wordembed_forward.2} parent=1 // pred_fallthru
      _
    // Predicated region
    $region30: #{decoder_wordembed_forward.2} parent=1 // pred_check
      _
    $region31: #{decoder_wordembed_forward.2} parent=1 // pred_check_branch
      %61 = sbr.rel (0) target = $region33
    $region32: #{decoder_wordembed_forward.2} parent=1 // pred_region
      _
    $region33: #{decoder_wordembed_forward.2} parent=1 // pred_fallthru
      _
    // Predicated region
    $region34: #{decoder_wordembed_forward.2} parent=1 // pred_check
      _
    $region35: #{decoder_wordembed_forward.2} parent=1 // pred_check_branch
      %63 = sbr.rel (0) target = $region37
    $region36: #{decoder_wordembed_forward.2} parent=1 // pred_region
      _
    $region37: #{decoder_wordembed_forward.2} parent=1 // pred_fallthru
      _
    // Predicated region
    $region38: #{decoder_wordembed_forward.2} parent=1 // pred_check
      _
    $region39: #{decoder_wordembed_forward.2} parent=1 // pred_check_branch
      %65 = sbr.rel (0) target = $region41
    $region40: #{decoder_wordembed_forward.2} parent=1 // pred_region
      %66 = dma.done [#allocation3], 2048
    $region41: #{decoder_wordembed_forward.2} parent=1 // pred_fallthru
      _
    // Predicated region
    $region42: #{decoder_wordembed_forward.2} parent=1 // pred_check
      _
    $region43: #{decoder_wordembed_forward.2} parent=1 // pred_check_branch
      %68 = sbr.rel (0) target = $region45
    $region44: #{decoder_wordembed_forward.2} parent=1 // pred_region
      %69 = dma.done [#allocation5], 2048
    $region45: #{decoder_wordembed_forward.2} parent=1 // pred_fallthru
      _
    // Predicated region
    $region46: #{decoder_wordembed_forward.2} parent=1 // pred_check
      _
    $region47: #{decoder_wordembed_forward.2} parent=1 // pred_check_branch
      %71 = sbr.rel (0) target = $region49
    $region48: #{decoder_wordembed_forward.2} parent=1 // pred_region
      %72 = dma.done [#allocation5], 2048
    $region49: #{decoder_wordembed_forward.2} parent=1 // pred_fallthru
      _
    %v73 = vld [vmem:[#allocation2] sm:$0xff]
    %v74 = vld [vmem:[#allocation2 + $0x8] sm:$0xff]
    %v75 = vld [vmem:[#allocation2 + $0x10] sm:$0xff]
    %v76 = vld [vmem:[#allocation2 + $0x18] sm:$0xff]
    %v77 = vld [vmem:[#allocation2 + $0x20] sm:$0xff]
    %v78 = vld [vmem:[#allocation2 + $0x28] sm:$0xff]
    %v79 = vld [vmem:[#allocation2 + $0x30] sm:$0xff]
    %v80 = vld [vmem:[#allocation2 + $0x38] sm:$0xff]
    %v81 = vld [vmem:[#allocation2 + $0x40] sm:$0xff]
    %v82 = vld [vmem:[#allocation2 + $0x48] sm:$0xff]
    %v83 = vld [vmem:[#allocation2 + $0x50] sm:$0xff]
    %v84 = vld [vmem:[#allocation2 + $0x58] sm:$0xff]
    %v85 = vld [vmem:[#allocation2 + $0x60] sm:$0xff]
    %v86 = vld [vmem:[#allocation2 + $0x68] sm:$0xff]
    %v87 = vld [vmem:[#allocation2 + $0x70] sm:$0xff]
    %v88 = vld [vmem:[#allocation2 + $0x78] sm:$0xff]
    %v89 = vld [vmem:[#allocation4] sm:$0xff]
    %v90 = vld [vmem:[#allocation4 + $0x8] sm:$0xff]
    %v91 = vld [vmem:[#allocation4 + $0x10] sm:$0xff]
    %v92 = vld [vmem:[#allocation4 + $0x18] sm:$0xff]
    %v93 = vld [vmem:[#allocation4 + $0x20] sm:$0xff]
    %v94 = vld [vmem:[#allocation4 + $0x28] sm:$0xff]
    %v95 = vld [vmem:[#allocation4 + $0x30] sm:$0xff]
    %v96 = vld [vmem:[#allocation4 + $0x38] sm:$0xff]
    %v97 = vld [vmem:[#allocation4 + $0x40] sm:$0xff]
    %v98 = vld [vmem:[#allocation4 + $0x48] sm:$0xff]
    %v99 = vld [vmem:[#allocation4 + $0x50] sm:$0xff]
    %v100 = vld [vmem:[#allocation4 + $0x58] sm:$0xff]
    %v101 = vld [vmem:[#allocation4 + $0x60] sm:$0xff]
    %v102 = vld [vmem:[#allocation4 + $0x68] sm:$0xff]
    %v103 = vld [vmem:[#allocation4 + $0x70] sm:$0xff]
    %v104 = vld [vmem:[#allocation4 + $0x78] sm:$0xff]
    %v105 = vld [vmem:[%s2] sm:$0x1]
    %v107 = vlaneseq
    %v108 = vshrl.u32 %v107, 7
    %v109 = vsub.s32 0, %v108
    %v110 = vrot.slane %v105, %v109
    %112 = vmatprep.subr.mxu0 0.0
    %113 = vmatpush1.msra.mxu0 %v89
    %114 = vmatprep.subr.mxu0 0.0
    %115 = vmatpush1.msra.mxu0 %v90
    %116 = vmatprep.subr.mxu0 0.0
    %117 = vmatpush1.msra.mxu0 %v91
    %118 = vmatprep.subr.mxu0 0.0
    %119 = vmatpush1.msra.mxu0 %v92
    %120 = vmatprep.subr.mxu0 0.0
    %121 = vmatpush1.msra.mxu0 %v93
    %122 = vmatprep.subr.mxu0 0.0
    %123 = vmatpush1.msra.mxu0 %v94
    %124 = vmatprep.subr.mxu0 0.0
    %125 = vmatpush1.msra.mxu0 %v95
    %126 = vmatprep.subr.mxu0 0.0
    %127 = vmatpush1.msra.mxu0 %v96
    %128 = vmatprep.subr.mxu0 0.0
    %129 = vmatpush1.msra.mxu0 %v97
    %130 = vmatprep.subr.mxu0 0.0
    %131 = vmatpush1.msra.mxu0 %v98
    %132 = vmatprep.subr.mxu0 0.0
    %133 = vmatpush1.msra.mxu0 %v99
    %134 = vmatprep.subr.mxu0 0.0
    %135 = vmatpush1.msra.mxu0 %v100
    %136 = vmatprep.subr.mxu0 0.0
    %137 = vmatpush1.msra.mxu0 %v101
    %138 = vmatprep.subr.mxu0 0.0
    %139 = vmatpush1.msra.mxu0 %v102
    %140 = vmatprep.subr.mxu0 0.0
    %141 = vmatpush1.msra.mxu0 %v103
    %142 = vmatprep.subr.mxu0 0.0
    %143 = vmatpush1.msra.mxu0 %v104
    %144 = vmatprep.subr.mxu0 0.0
    %145 = vmatpush1.msra.mxu0 0.0
    %146 = vmatprep.subr.mxu0 0.0
    %147 = vmatpush1.msra.mxu0 0.0
    %148 = vmatprep.subr.mxu0 0.0
    %149 = vmatpush1.msra.mxu0 0.0
    %150 = vmatprep.subr.mxu0 0.0
    %151 = vmatpush1.msra.mxu0 0.0
    %152 = vmatprep.subr.mxu0 0.0
    %153 = vmatpush1.msra.mxu0 0.0
    %154 = vmatprep.subr.mxu0 0.0
    %155 = vmatpush1.msra.mxu0 0.0
    %156 = vmatprep.subr.mxu0 0.0
    %157 = vmatpush1.msra.mxu0 0.0
    %158 = vmatprep.subr.mxu0 0.0
    %159 = vmatpush1.msra.mxu0 0.0
    %160 = vmatprep.subr.mxu0 0.0
    %161 = vmatpush1.msra.mxu0 0.0
    %162 = vmatprep.subr.mxu0 0.0
    %163 = vmatpush1.msra.mxu0 0.0
    %164 = vmatprep.subr.mxu0 0.0
    %165 = vmatpush1.msra.mxu0 0.0
    %166 = vmatprep.subr.mxu0 0.0
    %167 = vmatpush1.msra.mxu0 0.0
    %168 = vmatprep.subr.mxu0 0.0
    %169 = vmatpush1.msra.mxu0 0.0
    %170 = vmatprep.subr.mxu0 0.0
    %171 = vmatpush1.msra.mxu0 0.0
    %172 = vmatprep.subr.mxu0 0.0
    %173 = vmatpush1.msra.mxu0 0.0
    %174 = vmatprep.subr.mxu0 0.0
    %175 = vmatpush1.msra.mxu0 0.0
    %176 = vmatprep.mubr.f32.mxu0 0.0
    %177 = vmatmul.mubr.f32.gmra.mrb[0].mxu0 %v73
    %v178 = vpop.f32.mrb[0].mxu0
    %v179 = vadd.f32 %v110, %v178
    %v180 = vpop.f32.mrb[0].mxu0
    %181 = vmatprep.mubr.f32.mxu0 0.0
    %182 = vmatmul.mubr.f32.gmra.mrb[0].mxu0 %v74
    %v183 = vpop.f32.mrb[0].mxu0
    %v184 = vadd.f32 %v110, %v183
    %v185 = vpop.f32.mrb[0].mxu0
    %186 = vmatprep.mubr.f32.mxu0 0.0
    %187 = vmatmul.mubr.f32.gmra.mrb[0].mxu0 %v75
    %v188 = vpop.f32.mrb[0].mxu0
    %v189 = vadd.f32 %v110, %v188
    %v190 = vpop.f32.mrb[0].mxu0
    %191 = vmatprep.mubr.f32.mxu0 0.0
    %192 = vmatmul.mubr.f32.gmra.mrb[0].mxu0 %v76
    %v193 = vpop.f32.mrb[0].mxu0
    %v194 = vadd.f32 %v110, %v193
    %v195 = vpop.f32.mrb[0].mxu0
    %196 = vmatprep.mubr.f32.mxu0 0.0
    %197 = vmatmul.mubr.f32.gmra.mrb[0].mxu0 %v77
    %v198 = vpop.f32.mrb[0].mxu0
    %v199 = vadd.f32 %v110, %v198
    %v200 = vpop.f32.mrb[0].mxu0
    %201 = vmatprep.mubr.f32.mxu0 0.0
    %202 = vmatmul.mubr.f32.gmra.mrb[0].mxu0 %v78
    %v203 = vpop.f32.mrb[0].mxu0
    %v204 = vadd.f32 %v110, %v203
    %v205 = vpop.f32.mrb[0].mxu0
    %206 = vmatprep.mubr.f32.mxu0 0.0
    %207 = vmatmul.mubr.f32.gmra.mrb[0].mxu0 %v79
    %v208 = vpop.f32.mrb[0].mxu0
    %v209 = vadd.f32 %v110, %v208
    %v210 = vpop.f32.mrb[0].mxu0
    %211 = vmatprep.mubr.f32.mxu0 0.0
    %212 = vmatmul.mubr.f32.gmra.mrb[0].mxu0 %v80
    %v213 = vpop.f32.mrb[0].mxu0
    %v214 = vadd.f32 %v110, %v213
    %v215 = vpop.f32.mrb[0].mxu0
    %216 = vmatprep.mubr.f32.mxu0 0.0
    %217 = vmatmul.mubr.f32.gmra.mrb[0].mxu0 %v81
    %v218 = vpop.f32.mrb[0].mxu0
    %v219 = vadd.f32 %v110, %v218
    %v220 = vpop.f32.mrb[0].mxu0
    %221 = vmatprep.mubr.f32.mxu0 0.0
    %222 = vmatmul.mubr.f32.gmra.mrb[0].mxu0 %v82
    %v223 = vpop.f32.mrb[0].mxu0
    %v224 = vadd.f32 %v110, %v223
    %v225 = vpop.f32.mrb[0].mxu0
    %226 = vmatprep.mubr.f32.mxu0 0.0
    %227 = vmatmul.mubr.f32.gmra.mrb[0].mxu0 %v83
    %v228 = vpop.f32.mrb[0].mxu0
    %v229 = vadd.f32 %v110, %v228
    %v230 = vpop.f32.mrb[0].mxu0
    %231 = vmatprep.mubr.f32.mxu0 0.0
    %232 = vmatmul.mubr.f32.gmra.mrb[0].mxu0 %v84
    %v233 = vpop.f32.mrb[0].mxu0
    %v234 = vadd.f32 %v110, %v233
    %v235 = vpop.f32.mrb[0].mxu0
    %236 = vmatprep.mubr.f32.mxu0 0.0
    %237 = vmatmul.mubr.f32.gmra.mrb[0].mxu0 %v85
    %v238 = vpop.f32.mrb[0].mxu0
    %v239 = vadd.f32 %v110, %v238
    %v240 = vpop.f32.mrb[0].mxu0
    %241 = vmatprep.mubr.f32.mxu0 0.0
    %242 = vmatmul.mubr.f32.gmra.mrb[0].mxu0 %v86
    %v243 = vpop.f32.mrb[0].mxu0
    %v244 = vadd.f32 %v110, %v243
    %v245 = vpop.f32.mrb[0].mxu0
    %246 = vmatprep.mubr.f32.mxu0 0.0
    %247 = vmatmul.mubr.f32.gmra.mrb[0].mxu0 %v87
    %v248 = vpop.f32.mrb[0].mxu0
    %v249 = vadd.f32 %v110, %v248
    %v250 = vpop.f32.mrb[0].mxu0
    %251 = vmatprep.mubr.f32.mxu0 0.0
    %252 = vmatmul.mubr.f32.gmra.mrb[0].mxu0 %v88
    %v253 = vpop.f32.mrb[0].mxu0
    %v254 = vadd.f32 %v110, %v253
    %v255 = vpop.f32.mrb[0].mxu0
    %256 = vdwg.mxu0
    %v257 = vadd.f32 %v179, %v184
    %v258 = vadd.f32 %v257, %v189
    %v259 = vadd.f32 %v258, %v194
    %v260 = vadd.f32 %v259, %v199
    %v261 = vadd.f32 %v260, %v204
    %v262 = vadd.f32 %v261, %v209
    %v263 = vadd.f32 %v262, %v214
    %v264 = vadd.f32 %v263, %v219
    %v265 = vadd.f32 %v264, %v224
    %v266 = vadd.f32 %v265, %v229
    %v267 = vadd.f32 %v266, %v234
    %v268 = vadd.f32 %v267, %v239
    %v269 = vadd.f32 %v268, %v244
    %v270 = vadd.f32 %v269, %v249
    %v271 = vadd.f32 %v270, %v254
    %v272 = vrot.slane %v271, 4
    %v273 = vadd.f32 %v271, %v272
    %v274 = vrot.slane %v273, 2
    %v275 = vadd.f32 %v273, %v274
    %v276 = vrot.slane %v275, 1
    %v277 = vadd.f32 %v275, %v276
    %v278 = vrcp.pop 128.0
    %v279 = vmul.f32 %v277, %v278
    %v280 = vsub.f32 %v179, %v279
    %v281 = vsub.f32 %v184, %v279
    %v282 = vsub.f32 %v189, %v279
    %v283 = vsub.f32 %v194, %v279
    %v284 = vsub.f32 %v199, %v279
    %v285 = vsub.f32 %v204, %v279
    %v286 = vsub.f32 %v209, %v279
    %v287 = vsub.f32 %v214, %v279
    %v288 = vsub.f32 %v219, %v279
    %v289 = vsub.f32 %v224, %v279
    %v290 = vsub.f32 %v229, %v279
    %v291 = vsub.f32 %v234, %v279
    %v292 = vsub.f32 %v239, %v279
    %v293 = vsub.f32 %v244, %v279
    %v294 = vsub.f32 %v249, %v279
    %v295 = vsub.f32 %v254, %v279
    %v296 = vmul.f32 %v280, %v280
    %v297 = vmul.f32 %v281, %v281
    %v298 = vmul.f32 %v282, %v282
    %v299 = vmul.f32 %v283, %v283
    %v300 = vmul.f32 %v284, %v284
    %v301 = vmul.f32 %v285, %v285
    %v302 = vmul.f32 %v286, %v286
    %v303 = vmul.f32 %v287, %v287
    %v304 = vmul.f32 %v288, %v288
    %v305 = vmul.f32 %v289, %v289
    %v306 = vmul.f32 %v290, %v290
    %v307 = vmul.f32 %v291, %v291
    %v308 = vmul.f32 %v292, %v292
    %v309 = vmul.f32 %v293, %v293
    %v310 = vmul.f32 %v294, %v294
    %v311 = vmul.f32 %v295, %v295
    %v312 = vadd.f32 %v296, %v297
    %v313 = vadd.f32 %v312, %v298
    %v314 = vadd.f32 %v313, %v299
    %v315 = vadd.f32 %v314, %v300
    %v316 = vadd.f32 %v315, %v301
    %v317 = vadd.f32 %v316, %v302
    %v318 = vadd.f32 %v317, %v303
    %v319 = vadd.f32 %v318, %v304
    %v320 = vadd.f32 %v319, %v305
    %v321 = vadd.f32 %v320, %v306
    %v322 = vadd.f32 %v321, %v307
    %v323 = vadd.f32 %v322, %v308
    %v324 = vadd.f32 %v323, %v309
    %v325 = vadd.f32 %v324, %v310
    %v326 = vadd.f32 %v325, %v311
    %v327 = vrot.slane %v326, 4
    %v328 = vadd.f32 %v326, %v327
    %v329 = vrot.slane %v328, 2
    %v330 = vadd.f32 %v328, %v329
    %v331 = vrot.slane %v330, 1
    %v332 = vadd.f32 %v330, %v331
    %v333 = vmul.f32 %v332, %v278
    %v334 = vadd.f32 %v333, 1e-05
    %v335 = vrsqrt.pop %v334
    %v336 = vmul.f32 %v280, %v335
    %v337 = vmul.f32 %v281, %v335
    %v338 = vmul.f32 %v282, %v335
    %v339 = vmul.f32 %v283, %v335
    %v340 = vmul.f32 %v284, %v335
    %v341 = vmul.f32 %v285, %v335
    %v342 = vmul.f32 %v286, %v335
    %v343 = vmul.f32 %v287, %v335
    %v344 = vmul.f32 %v288, %v335
    %v345 = vmul.f32 %v289, %v335
    %v346 = vmul.f32 %v290, %v335
    %v347 = vmul.f32 %v291, %v335
    %v348 = vmul.f32 %v292, %v335
    %v349 = vmul.f32 %v293, %v335
    %v350 = vmul.f32 %v294, %v335
    %v351 = vmul.f32 %v295, %v335
    %v352 = vld [vmem:[%s3] sm:$0x1]
    %v354 = vlaneseq
    %v355 = vshrl.u32 %v354, 7
    %v356 = vsub.s32 0, %v355
    %v357 = vrot.slane %v352, %v356
    %v359 = vmul.f32 %v336, %v357
    %v360 = vmul.f32 %v337, %v357
    %v361 = vmul.f32 %v338, %v357
    %v362 = vmul.f32 %v339, %v357
    %v363 = vmul.f32 %v340, %v357
    %v364 = vmul.f32 %v341, %v357
    %v365 = vmul.f32 %v342, %v357
    %v366 = vmul.f32 %v343, %v357
    %v367 = vmul.f32 %v344, %v357
    %v368 = vmul.f32 %v345, %v357
    %v369 = vmul.f32 %v346, %v357
    %v370 = vmul.f32 %v347, %v357
    %v371 = vmul.f32 %v348, %v357
    %v372 = vmul.f32 %v349, %v357
    %v373 = vmul.f32 %v350, %v357
    %v374 = vmul.f32 %v351, %v357
    %v375 = vld [vmem:[%s4] sm:$0x1]
    %v377 = vlaneseq
    %v378 = vshrl.u32 %v377, 7
    %v379 = vsub.s32 0, %v378
    %v380 = vrot.slane %v375, %v379
    %v382 = vadd.f32 %v359, %v380
    %v383 = vadd.f32 %v360, %v380
    %v384 = vadd.f32 %v361, %v380
    %v385 = vadd.f32 %v362, %v380
    %v386 = vadd.f32 %v363, %v380
    %v387 = vadd.f32 %v364, %v380
    %v388 = vadd.f32 %v365, %v380
    %v389 = vadd.f32 %v366, %v380
    %v390 = vadd.f32 %v367, %v380
    %v391 = vadd.f32 %v368, %v380
    %v392 = vadd.f32 %v369, %v380
    %v393 = vadd.f32 %v370, %v380
    %v394 = vadd.f32 %v371, %v380
    %v395 = vadd.f32 %v372, %v380
    %v396 = vadd.f32 %v373, %v380
    %v397 = vadd.f32 %v374, %v380
    %v398 = vmul.f32 %v382, 0.5
    %v399 = vmul.f32 %v383, 0.5
    %v400 = vmul.f32 %v384, 0.5
    %v401 = vmul.f32 %v385, 0.5
    %v402 = vmul.f32 %v386, 0.5
    %v403 = vmul.f32 %v387, 0.5
    %v404 = vmul.f32 %v388, 0.5
    %v405 = vmul.f32 %v389, 0.5
    %v406 = vmul.f32 %v390, 0.5
    %v407 = vmul.f32 %v391, 0.5
    %v408 = vmul.f32 %v392, 0.5
    %v409 = vmul.f32 %v393, 0.5
    %v410 = vmul.f32 %v394, 0.5
    %v411 = vmul.f32 %v395, 0.5
    %v412 = vmul.f32 %v396, 0.5
    %v413 = vmul.f32 %v397, 0.5
    %v414 = vtanh.pop %v398
    %v415 = vtanh.pop %v399
    %v416 = vtanh.pop %v400
    %v417 = vtanh.pop %v401
    %v418 = vtanh.pop %v402
    %v419 = vtanh.pop %v403
    %v420 = vtanh.pop %v404
    %v421 = vtanh.pop %v405
    %v422 = vtanh.pop %v406
    %v423 = vtanh.pop %v407
    %v424 = vtanh.pop %v408
    %v425 = vtanh.pop %v409
    %v426 = vtanh.pop %v410
    %v427 = vtanh.pop %v411
    %v428 = vtanh.pop %v412
    %v429 = vtanh.pop %v413
    %v430 = vmul.f32 %v414, 0.5
    %v431 = vmul.f32 %v415, 0.5
    %v432 = vmul.f32 %v416, 0.5
    %v433 = vmul.f32 %v417, 0.5
    %v434 = vmul.f32 %v418, 0.5
    %v435 = vmul.f32 %v419, 0.5
    %v436 = vmul.f32 %v420, 0.5
    %v437 = vmul.f32 %v421, 0.5
    %v438 = vmul.f32 %v422, 0.5
    %v439 = vmul.f32 %v423, 0.5
    %v440 = vmul.f32 %v424, 0.5
    %v441 = vmul.f32 %v425, 0.5
    %v442 = vmul.f32 %v426, 0.5
    %v443 = vmul.f32 %v427, 0.5
    %v444 = vmul.f32 %v428, 0.5
    %v445 = vmul.f32 %v429, 0.5
    %v446 = vadd.f32 %v430, 0.5
    %v447 = vadd.f32 %v431, 0.5
    %v448 = vadd.f32 %v432, 0.5
    %v449 = vadd.f32 %v433, 0.5
    %v450 = vadd.f32 %v434, 0.5
    %v451 = vadd.f32 %v435, 0.5
    %v452 = vadd.f32 %v436, 0.5
    %v453 = vadd.f32 %v437, 0.5
    %v454 = vadd.f32 %v438, 0.5
    %v455 = vadd.f32 %v439, 0.5
    %v456 = vadd.f32 %v440, 0.5
    %v457 = vadd.f32 %v441, 0.5
    %v458 = vadd.f32 %v442, 0.5
    %v459 = vadd.f32 %v443, 0.5
    %v460 = vadd.f32 %v444, 0.5
    %v461 = vadd.f32 %v445, 0.5
    %v462 = vld [vmem:[#allocation6] sm:$0xff]
    %v463 = vld [vmem:[#allocation6 + $0x8] sm:$0xff]
    %v464 = vld [vmem:[#allocation6 + $0x10] sm:$0xff]
    %v465 = vld [vmem:[#allocation6 + $0x18] sm:$0xff]
    %v466 = vld [vmem:[#allocation6 + $0x20] sm:$0xff]
    %v467 = vld [vmem:[#allocation6 + $0x28] sm:$0xff]
    %v468 = vld [vmem:[#allocation6 + $0x30] sm:$0xff]
    %v469 = vld [vmem:[#allocation6 + $0x38] sm:$0xff]
    %v470 = vld [vmem:[#allocation6 + $0x40] sm:$0xff]
    %v471 = vld [vmem:[#allocation6 + $0x48] sm:$0xff]
    %v472 = vld [vmem:[#allocation6 + $0x50] sm:$0xff]
    %v473 = vld [vmem:[#allocation6 + $0x58] sm:$0xff]
    %v474 = vld [vmem:[#allocation6 + $0x60] sm:$0xff]
    %v475 = vld [vmem:[#allocation6 + $0x68] sm:$0xff]
    %v476 = vld [vmem:[#allocation6 + $0x70] sm:$0xff]
    %v477 = vld [vmem:[#allocation6 + $0x78] sm:$0xff]
    %v478 = vld [vmem:[%s6] sm:$0x1]
    %v480 = vlaneseq
    %v481 = vshrl.u32 %v480, 7
    %v482 = vsub.s32 0, %v481
    %v483 = vrot.slane %v478, %v482
    %485 = vmatprep.subr.mxu0 0.0
    %486 = vmatpush1.msra.mxu0 %v462
    %487 = vmatprep.subr.mxu0 0.0
    %488 = vmatpush1.msra.mxu0 %v463
    %489 = vmatprep.subr.mxu0 0.0
    %490 = vmatpush1.msra.mxu0 %v464
    %491 = vmatprep.subr.mxu0 0.0
    %492 = vmatpush1.msra.mxu0 %v465
    %493 = vmatprep.subr.mxu0 0.0
    %494 = vmatpush1.msra.mxu0 %v466
    %495 = vmatprep.subr.mxu0 0.0
    %496 = vmatpush1.msra.mxu0 %v467
    %497 = vmatprep.subr.mxu0 0.0
    %498 = vmatpush1.msra.mxu0 %v468
    %499 = vmatprep.subr.mxu0 0.0
    %500 = vmatpush1.msra.mxu0 %v469
    %501 = vmatprep.subr.mxu0 0.0
    %502 = vmatpush1.msra.mxu0 %v470
    %503 = vmatprep.subr.mxu0 0.0
    %504 = vmatpush1.msra.mxu0 %v471
    %505 = vmatprep.subr.mxu0 0.0
    %506 = vmatpush1.msra.mxu0 %v472
    %507 = vmatprep.subr.mxu0 0.0
    %508 = vmatpush1.msra.mxu0 %v473
    %509 = vmatprep.subr.mxu0 0.0
    %510 = vmatpush1.msra.mxu0 %v474
    %511 = vmatprep.subr.mxu0 0.0
    %512 = vmatpush1.msra.mxu0 %v475
    %513 = vmatprep.subr.mxu0 0.0
    %514 = vmatpush1.msra.mxu0 %v476
    %515 = vmatprep.subr.mxu0 0.0
    %516 = vmatpush1.msra.mxu0 %v477
    %517 = vmatprep.subr.mxu0 0.0
    %518 = vmatpush1.msra.mxu0 0.0
    %519 = vmatprep.subr.mxu0 0.0
    %520 = vmatpush1.msra.mxu0 0.0
    %521 = vmatprep.subr.mxu0 0.0
    %522 = vmatpush1.msra.mxu0 0.0
    %523 = vmatprep.subr.mxu0 0.0
    %524 = vmatpush1.msra.mxu0 0.0
    %525 = vmatprep.subr.mxu0 0.0
    %526 = vmatpush1.msra.mxu0 0.0
    %527 = vmatprep.subr.mxu0 0.0
    %528 = vmatpush1.msra.mxu0 0.0
    %529 = vmatprep.subr.mxu0 0.0
    %530 = vmatpush1.msra.mxu0 0.0
    %531 = vmatprep.subr.mxu0 0.0
    %532 = vmatpush1.msra.mxu0 0.0
    %533 = vmatprep.subr.mxu0 0.0
    %534 = vmatpush1.msra.mxu0 0.0
    %535 = vmatprep.subr.mxu0 0.0
    %536 = vmatpush1.msra.mxu0 0.0
    %537 = vmatprep.subr.mxu0 0.0
    %538 = vmatpush1.msra.mxu0 0.0
    %539 = vmatprep.subr.mxu0 0.0
    %540 = vmatpush1.msra.mxu0 0.0
    %541 = vmatprep.subr.mxu0 0.0
    %542 = vmatpush1.msra.mxu0 0.0
    %543 = vmatprep.subr.mxu0 0.0
    %544 = vmatpush1.msra.mxu0 0.0
    %545 = vmatprep.subr.mxu0 0.0
    %546 = vmatpush1.msra.mxu0 0.0
    %547 = vmatprep.subr.mxu0 0.0
    %548 = vmatpush1.msra.mxu0 0.0
    %549 = vmatprep.mubr.f32.mxu0 0.0
    %550 = vmatmul.mubr.f32.gmra.mrb[0].mxu0 %v446
    %v551 = vpop.f32.mrb[0].mxu0
    %v552 = vadd.f32 %v483, %v551
    %v553 = vpop.f32.mrb[0].mxu0
    %554 = vmatprep.mubr.f32.mxu0 0.0
    %555 = vmatmul.mubr.f32.gmra.mrb[0].mxu0 %v447
    %v556 = vpop.f32.mrb[0].mxu0
    %v557 = vadd.f32 %v483, %v556
    %v558 = vpop.f32.mrb[0].mxu0
    %559 = vmatprep.mubr.f32.mxu0 0.0
    %560 = vmatmul.mubr.f32.gmra.mrb[0].mxu0 %v448
    %v561 = vpop.f32.mrb[0].mxu0
    %v562 = vadd.f32 %v483, %v561
    %v563 = vpop.f32.mrb[0].mxu0
    %564 = vmatprep.mubr.f32.mxu0 0.0
    %565 = vmatmul.mubr.f32.gmra.mrb[0].mxu0 %v449
    %v566 = vpop.f32.mrb[0].mxu0
    %v567 = vadd.f32 %v483, %v566
    %v568 = vpop.f32.mrb[0].mxu0
    %569 = vmatprep.mubr.f32.mxu0 0.0
    %570 = vmatmul.mubr.f32.gmra.mrb[0].mxu0 %v450
    %v571 = vpop.f32.mrb[0].mxu0
    %v572 = vadd.f32 %v483, %v571
    %v573 = vpop.f32.mrb[0].mxu0
    %574 = vmatprep.mubr.f32.mxu0 0.0
    %575 = vmatmul.mubr.f32.gmra.mrb[0].mxu0 %v451
    %v576 = vpop.f32.mrb[0].mxu0
    %v577 = vadd.f32 %v483, %v576
    %v578 = vpop.f32.mrb[0].mxu0
    %579 = vmatprep.mubr.f32.mxu0 0.0
    %580 = vmatmul.mubr.f32.gmra.mrb[0].mxu0 %v452
    %v581 = vpop.f32.mrb[0].mxu0
    %v582 = vadd.f32 %v483, %v581
    %v583 = vpop.f32.mrb[0].mxu0
    %584 = vmatprep.mubr.f32.mxu0 0.0
    %585 = vmatmul.mubr.f32.gmra.mrb[0].mxu0 %v453
    %v586 = vpop.f32.mrb[0].mxu0
    %v587 = vadd.f32 %v483, %v586
    %v588 = vpop.f32.mrb[0].mxu0
    %589 = vmatprep.mubr.f32.mxu0 0.0
    %590 = vmatmul.mubr.f32.gmra.mrb[0].mxu0 %v454
    %v591 = vpop.f32.mrb[0].mxu0
    %v592 = vadd.f32 %v483, %v591
    %v593 = vpop.f32.mrb[0].mxu0
    %594 = vmatprep.mubr.f32.mxu0 0.0
    %595 = vmatmul.mubr.f32.gmra.mrb[0].mxu0 %v455
    %v596 = vpop.f32.mrb[0].mxu0
    %v597 = vadd.f32 %v483, %v596
    %v598 = vpop.f32.mrb[0].mxu0
    %599 = vmatprep.mubr.f32.mxu0 0.0
    %600 = vmatmul.mubr.f32.gmra.mrb[0].mxu0 %v456
    %v601 = vpop.f32.mrb[0].mxu0
    %v602 = vadd.f32 %v483, %v601
    %v603 = vpop.f32.mrb[0].mxu0
    %604 = vmatprep.mubr.f32.mxu0 0.0
    %605 = vmatmul.mubr.f32.gmra.mrb[0].mxu0 %v457
    %v606 = vpop.f32.mrb[0].mxu0
    %v607 = vadd.f32 %v483, %v606
    %v608 = vpop.f32.mrb[0].mxu0
    %609 = vmatprep.mubr.f32.mxu0 0.0
    %610 = vmatmul.mubr.f32.gmra.mrb[0].mxu0 %v458
    %v611 = vpop.f32.mrb[0].mxu0
    %v612 = vadd.f32 %v483, %v611
    %v613 = vpop.f32.mrb[0].mxu0
    %614 = vmatprep.mubr.f32.mxu0 0.0
    %615 = vmatmul.mubr.f32.gmra.mrb[0].mxu0 %v459
    %v616 = vpop.f32.mrb[0].mxu0
    %v617 = vadd.f32 %v483, %v616
    %v618 = vpop.f32.mrb[0].mxu0
    %619 = vmatprep.mubr.f32.mxu0 0.0
    %620 = vmatmul.mubr.f32.gmra.mrb[0].mxu0 %v460
    %v621 = vpop.f32.mrb[0].mxu0
    %v622 = vadd.f32 %v483, %v621
    %v623 = vpop.f32.mrb[0].mxu0
    %624 = vmatprep.mubr.f32.mxu0 0.0
    %625 = vmatmul.mubr.f32.gmra.mrb[0].mxu0 %v461
    %v626 = vpop.f32.mrb[0].mxu0
    %v627 = vadd.f32 %v483, %v626
    %v628 = vpop.f32.mrb[0].mxu0
    %629 = vdwg.mxu0
    %v630 = vadd.f32 %v552, %v557
    %v631 = vadd.f32 %v630, %v562
    %v632 = vadd.f32 %v631, %v567
    %v633 = vadd.f32 %v632, %v572
    %v634 = vadd.f32 %v633, %v577
    %v635 = vadd.f32 %v634, %v582
    %v636 = vadd.f32 %v635, %v587
    %v637 = vadd.f32 %v636, %v592
    %v638 = vadd.f32 %v637, %v597
    %v639 = vadd.f32 %v638, %v602
    %v640 = vadd.f32 %v639, %v607
    %v641 = vadd.f32 %v640, %v612
    %v642 = vadd.f32 %v641, %v617
    %v643 = vadd.f32 %v642, %v622
    %v644 = vadd.f32 %v643, %v627
    %v645 = vrot.slane %v644, 4
    %v646 = vadd.f32 %v644, %v645
    %v647 = vrot.slane %v646, 2
    %v648 = vadd.f32 %v646, %v647
    %v649 = vrot.slane %v648, 1
    %v650 = vadd.f32 %v648, %v649
    %v651 = vmul.f32 %v650, %v278
    %v652 = vsub.f32 %v552, %v651
    %v653 = vsub.f32 %v557, %v651
    %v654 = vsub.f32 %v562, %v651
    %v655 = vsub.f32 %v567, %v651
    %v656 = vsub.f32 %v572, %v651
    %v657 = vsub.f32 %v577, %v651
    %v658 = vsub.f32 %v582, %v651
    %v659 = vsub.f32 %v587, %v651
    %v660 = vsub.f32 %v592, %v651
    %v661 = vsub.f32 %v597, %v651
    %v662 = vsub.f32 %v602, %v651
    %v663 = vsub.f32 %v607, %v651
    %v664 = vsub.f32 %v612, %v651
    %v665 = vsub.f32 %v617, %v651
    %v666 = vsub.f32 %v622, %v651
    %v667 = vsub.f32 %v627, %v651
    %v668 = vmul.f32 %v652, %v652
    %v669 = vmul.f32 %v653, %v653
    %v670 = vmul.f32 %v654, %v654
    %v671 = vmul.f32 %v655, %v655
    %v672 = vmul.f32 %v656, %v656
    %v673 = vmul.f32 %v657, %v657
    %v674 = vmul.f32 %v658, %v658
    %v675 = vmul.f32 %v659, %v659
    %v676 = vmul.f32 %v660, %v660
    %v677 = vmul.f32 %v661, %v661
    %v678 = vmul.f32 %v662, %v662
    %v679 = vmul.f32 %v663, %v663
    %v680 = vmul.f32 %v664, %v664
    %v681 = vmul.f32 %v665, %v665
    %v682 = vmul.f32 %v666, %v666
    %v683 = vmul.f32 %v667, %v667
    %v684 = vadd.f32 %v668, %v669
    %v685 = vadd.f32 %v684, %v670
    %v686 = vadd.f32 %v685, %v671
    %v687 = vadd.f32 %v686, %v672
    %v688 = vadd.f32 %v687, %v673
    %v689 = vadd.f32 %v688, %v674
    %v690 = vadd.f32 %v689, %v675
    %v691 = vadd.f32 %v690, %v676
    %v692 = vadd.f32 %v691, %v677
    %v693 = vadd.f32 %v692, %v678
    %v694 = vadd.f32 %v693, %v679
    %v695 = vadd.f32 %v694, %v680
    %v696 = vadd.f32 %v695, %v681
    %v697 = vadd.f32 %v696, %v682
    %v698 = vadd.f32 %v697, %v683
    %v699 = vrot.slane %v698, 4
    %v700 = vadd.f32 %v698, %v699
    %v701 = vrot.slane %v700, 2
    %v702 = vadd.f32 %v700, %v701
    %v703 = vrot.slane %v702, 1
    %v704 = vadd.f32 %v702, %v703
    %v705 = vmul.f32 %v704, %v278
    %v706 = vadd.f32 %v705, 1e-05
    %v707 = vrsqrt.pop %v706
    %v708 = vmul.f32 %v652, %v707
    %v709 = vmul.f32 %v653, %v707
    %v710 = vmul.f32 %v654, %v707
    %v711 = vmul.f32 %v655, %v707
    %v712 = vmul.f32 %v656, %v707
    %v713 = vmul.f32 %v657, %v707
    %v714 = vmul.f32 %v658, %v707
    %v715 = vmul.f32 %v659, %v707
    %v716 = vmul.f32 %v660, %v707
    %v717 = vmul.f32 %v661, %v707
    %v718 = vmul.f32 %v662, %v707
    %v719 = vmul.f32 %v663, %v707
    %v720 = vmul.f32 %v664, %v707
    %v721 = vmul.f32 %v665, %v707
    %v722 = vmul.f32 %v666, %v707
    %v723 = vmul.f32 %v667, %v707
    %v724 = vld [vmem:[%s7] sm:$0x1]
    %v726 = vlaneseq
    %v727 = vshrl.u32 %v726, 7
    %v728 = vsub.s32 0, %v727
    %v729 = vrot.slane %v724, %v728
    %v731 = vmul.f32 %v708, %v729
    %v732 = vmul.f32 %v709, %v729
    %v733 = vmul.f32 %v710, %v729
    %v734 = vmul.f32 %v711, %v729
    %v735 = vmul.f32 %v712, %v729
    %v736 = vmul.f32 %v713, %v729
    %v737 = vmul.f32 %v714, %v729
    %v738 = vmul.f32 %v715, %v729
    %v739 = vmul.f32 %v716, %v729
    %v740 = vmul.f32 %v717, %v729
    %v741 = vmul.f32 %v718, %v729
    %v742 = vmul.f32 %v719, %v729
    %v743 = vmul.f32 %v720, %v729
    %v744 = vmul.f32 %v721, %v729
    %v745 = vmul.f32 %v722, %v729
    %v746 = vmul.f32 %v723, %v729
    %v747 = vld [vmem:[%s8] sm:$0x1]
    %v749 = vlaneseq
    %v750 = vshrl.u32 %v749, 7
    %v751 = vsub.s32 0, %v750
    %v752 = vrot.slane %v747, %v751
    %v754 = vadd.f32 %v731, %v752
    %v755 = vadd.f32 %v732, %v752
    %v756 = vadd.f32 %v733, %v752
    %v757 = vadd.f32 %v734, %v752
    %v758 = vadd.f32 %v735, %v752
    %v759 = vadd.f32 %v736, %v752
    %v760 = vadd.f32 %v737, %v752
    %v761 = vadd.f32 %v738, %v752
    %v762 = vadd.f32 %v739, %v752
    %v763 = vadd.f32 %v740, %v752
    %v764 = vadd.f32 %v741, %v752
    %v765 = vadd.f32 %v742, %v752
    %v766 = vadd.f32 %v743, %v752
    %v767 = vadd.f32 %v744, %v752
    %v768 = vadd.f32 %v745, %v752
    %v769 = vadd.f32 %v746, %v752
    %v770 = vmul.f32 %v754, 0.5
    %v771 = vmul.f32 %v755, 0.5
    %v772 = vmul.f32 %v756, 0.5
    %v773 = vmul.f32 %v757, 0.5
    %v774 = vmul.f32 %v758, 0.5
    %v775 = vmul.f32 %v759, 0.5
    %v776 = vmul.f32 %v760, 0.5
    %v777 = vmul.f32 %v761, 0.5
    %v778 = vmul.f32 %v762, 0.5
    %v779 = vmul.f32 %v763, 0.5
    %v780 = vmul.f32 %v764, 0.5
    %v781 = vmul.f32 %v765, 0.5
    %v782 = vmul.f32 %v766, 0.5
    %v783 = vmul.f32 %v767, 0.5
    %v784 = vmul.f32 %v768, 0.5
    %v785 = vmul.f32 %v769, 0.5
    %v786 = vtanh.pop %v770
    %v787 = vtanh.pop %v771
    %v788 = vtanh.pop %v772
    %v789 = vtanh.pop %v773
    %v790 = vtanh.pop %v774
    %v791 = vtanh.pop %v775
    %v792 = vtanh.pop %v776
    %v793 = vtanh.pop %v777
    %v794 = vtanh.pop %v778
    %v795 = vtanh.pop %v779
    %v796 = vtanh.pop %v780
    %v797 = vtanh.pop %v781
    %v798 = vtanh.pop %v782
    %v799 = vtanh.pop %v783
    %v800 = vtanh.pop %v784
    %v801 = vtanh.pop %v785
    %v802 = vmul.f32 %v786, 0.5
    %v803 = vmul.f32 %v787, 0.5
    %v804 = vmul.f32 %v788, 0.5
    %v805 = vmul.f32 %v789, 0.5
    %v806 = vmul.f32 %v790, 0.5
    %v807 = vmul.f32 %v791, 0.5
    %v808 = vmul.f32 %v792, 0.5
    %v809 = vmul.f32 %v793, 0.5
    %v810 = vmul.f32 %v794, 0.5
    %v811 = vmul.f32 %v795, 0.5
    %v812 = vmul.f32 %v796, 0.5
    %v813 = vmul.f32 %v797, 0.5
    %v814 = vmul.f32 %v798, 0.5
    %v815 = vmul.f32 %v799, 0.5
    %v816 = vmul.f32 %v800, 0.5
    %v817 = vmul.f32 %v801, 0.5
    %v818 = vadd.f32 %v802, 0.5
    %v819 = vadd.f32 %v803, 0.5
    %v820 = vadd.f32 %v804, 0.5
    %v821 = vadd.f32 %v805, 0.5
    %v822 = vadd.f32 %v806, 0.5
    %v823 = vadd.f32 %v807, 0.5
    %v824 = vadd.f32 %v808, 0.5
    %v825 = vadd.f32 %v809, 0.5
    %v826 = vadd.f32 %v810, 0.5
    %v827 = vadd.f32 %v811, 0.5
    %v828 = vadd.f32 %v812, 0.5
    %v829 = vadd.f32 %v813, 0.5
    %v830 = vadd.f32 %v814, 0.5
    %v831 = vadd.f32 %v815, 0.5
    %v832 = vadd.f32 %v816, 0.5
    %v833 = vadd.f32 %v817, 0.5
    %v834 = vpack.c.bf16 %v819, %v818
    %v835 = vpack.c.bf16 %v821, %v820
    %v836 = vpack.c.bf16 %v823, %v822
    %v837 = vpack.c.bf16 %v825, %v824
    %v838 = vpack.c.bf16 %v827, %v826
    %v839 = vpack.c.bf16 %v829, %v828
    %v840 = vpack.c.bf16 %v831, %v830
    %v841 = vpack.c.bf16 %v833, %v832
    %v850 = vunpack.c.l.b16 %v834
    %v851 = vunpack.c.h.b16 %v834
    %v852 = vunpack.c.l.b16 %v835
    %v853 = vunpack.c.h.b16 %v835
    %v854 = vunpack.c.l.b16 %v836
    %v855 = vunpack.c.h.b16 %v836
    %v856 = vunpack.c.l.b16 %v837
    %v857 = vunpack.c.h.b16 %v837
    %v858 = vunpack.c.l.b16 %v838
    %v859 = vunpack.c.h.b16 %v838
    %v860 = vunpack.c.l.b16 %v839
    %v861 = vunpack.c.h.b16 %v839
    %v862 = vunpack.c.l.b16 %v840
    %v863 = vunpack.c.h.b16 %v840
    %v864 = vunpack.c.l.b16 %v841
    %v865 = vunpack.c.h.b16 %v841
    %v866 = vpack.c.b16 %v850, %v850
    %v867 = vpack.c.b16 %v851, %v851
    %v868 = vpack.c.b16 %v852, %v852
    %v869 = vpack.c.b16 %v853, %v853
    %v870 = vpack.c.b16 %v854, %v854
    %v871 = vpack.c.b16 %v855, %v855
    %v872 = vpack.c.b16 %v856, %v856
    %v873 = vpack.c.b16 %v857, %v857
    %v874 = vpack.c.b16 %v858, %v858
    %v875 = vpack.c.b16 %v859, %v859
    %v876 = vpack.c.b16 %v860, %v860
    %v877 = vpack.c.b16 %v861, %v861
    %v878 = vpack.c.b16 %v862, %v862
    %v879 = vpack.c.b16 %v863, %v863
    %v880 = vpack.c.b16 %v864, %v864
    %v881 = vpack.c.b16 %v865, %v865
    %898 = vst [vmem:[%s9] sm:$0xf] %v866
    %899 = vst [vmem:[%s9 + $0x4] sm:$0xf] %v867
    %900 = vst [vmem:[%s9 + $0x8] sm:$0xf] %v868
    %901 = vst [vmem:[%s9 + $0xc] sm:$0xf] %v869
    %902 = vst [vmem:[%s9 + $0x10] sm:$0xf] %v870
    %903 = vst [vmem:[%s9 + $0x14] sm:$0xf] %v871
    %904 = vst [vmem:[%s9 + $0x18] sm:$0xf] %v872
    %905 = vst [vmem:[%s9 + $0x1c] sm:$0xf] %v873
    %906 = vst [vmem:[%s9 + $0x20] sm:$0xf] %v874
    %907 = vst [vmem:[%s9 + $0x24] sm:$0xf] %v875
    %908 = vst [vmem:[%s9 + $0x28] sm:$0xf] %v876
    %909 = vst [vmem:[%s9 + $0x2c] sm:$0xf] %v877
    %910 = vst [vmem:[%s9 + $0x30] sm:$0xf] %v878
    %911 = vst [vmem:[%s9 + $0x34] sm:$0xf] %v879
    %912 = vst [vmem:[%s9 + $0x38] sm:$0xf] %v880
    %913 = vst [vmem:[%s9 + $0x3c] sm:$0xf] %v881
    // Predicated region
    $region50: #{decoder_wordembed_forward.2} parent=1 // pred_check
      _
    $region51: #{decoder_wordembed_forward.2} parent=1 // pred_check_branch
      %915 = sbr.rel (0) target = $region53
    $region52: #{decoder_wordembed_forward.2} parent=1 // pred_region
      _
    $region53: #{decoder_wordembed_forward.2} parent=1 // pred_fallthru
      _
    // Predicated region
    $region54: #{decoder_wordembed_forward.2} parent=1 // pred_check
      _
    $region55: #{decoder_wordembed_forward.2} parent=1 // pred_check_branch
      %917 = sbr.rel (0) target = $region57
    $region56: #{decoder_wordembed_forward.2} parent=1 // pred_region
      _
    $region57: #{decoder_wordembed_forward.2} parent=1 // pred_fallthru
      _
    %918 = vsyncpa [#allocation3], 1
    %919 = vsyncpa [#allocation5], 1

// kernel: decoder_wordembed_forward.3
$region0: #{decoder_wordembed_forward.3}
  #allocation0 [shape = 'u32[]', space=smem, size = 0x4, offset = 0x4, fixed_abs, tag = 'smem constant byte address 0x4 - core index']
  #allocation1 [shape = 'u32[144,128]{1,0:T(1,128)}', space=vmem, size = 0x12000, scoped, tag = 'internal scratch']
  %s0 = inlined_call_operand.vmem [shape: bf16[128,128], index: 0, kind: input, shape index: {}]
  %s1 = inlined_call_operand.vmem [shape: bf16[128,1024], index: 1, kind: input, shape index: {}]
  %s2 = inlined_call_operand.hbm [shape: f32[128,1024], index: 2, kind: output, shape index: {}]
  %s3 = sld [smem:[#allocation0]]
  $region64: #{decoder_wordembed_forward.3} parent=0
    _
  %s5 = ssub.s32 1, %s3
  %s6 = scalar_select 0, %s5, %s3
  $region1: #{decoder_wordembed_forward.3} parent=0
    #allocation2 [shape = 'u8[262144]{0}', space=vmem, size = 0x40000, scoped, tag = 'input window, operand 1']
    #allocation3 [shape = 'u8[524288]{0}', space=vmem, size = 0x80000, scoped, tag = 'output window, operand 0']
    #allocation4 [shape = 's32[2]{0}', space=sflag, size = 0x8, scoped, tag = 'scoped memory for decoder_wordembed_forward.3']
    %7 = vsyncpa [#allocation4], 0
    %s8 = scalar_lea.sflag [#allocation4], 1
    %9 = vsyncpa %s8, 0
    loop: start=0, step=1, limit=4
    $region2: #{decoder_wordembed_forward.3} parent=1 // loop_pre_header
      _
    $region3: #{decoder_wordembed_forward.3} parent=1 // loop_header
      %s11 = sphi 0, %s15
      %p12 = scmp.ge.s32.totalorder %s11, 4
      %s19 = sphi 0, %s19
      %s21 = sphi 0, %s19
      %s22 = sphi 0, %s21
      %s36 = sphi 0, %s22
      %s42 = sphi 0, %s44
      %s45 = sphi 0, %s42
      %s46 = sphi 0, %s45
      %s62 = sphi 0, %s46
      %s68 = sphi 0, %s70
      %s71 = sphi 0, %s68
      %s72 = sphi 0, %s71
      %s88 = sphi 0, %s72
    $region4: #{decoder_wordembed_forward.3} parent=1 // loop_header_branch
      %14 = sbr.rel (%p12) target = $region8
    $region5: #{decoder_wordembed_forward.3} parent=1 // loop_body
      %s16 = ssub.s32 %s11, 1
      %s17 = ssub.s32 %s11, 2
      %s18 = sadd.s32 %s11, 1
      %s20 = sadd.s32 %s19, 1
      %p23 = scmp.eq.s32.totalorder %s11, 1
      %p24 = scmp.ne.s32.totalorder %s19, %s21
      %p25 = scmp.eq.s32.totalorder %s11, 0
      %p26 = por %p24, %p25
      %p27 = scmp.ne.s32.totalorder %s19, %s21
      %p28 = scmp.eq.s32.totalorder %s16, 1
      %p29 = por %p27, %p28
      %p30 = scmp.ne.s32.totalorder %s21, %s22
      %p31 = scmp.eq.s32.totalorder %s16, 0
      %p32 = por %p30, %p31
      %p33 = scmp.ne.s32.totalorder %s21, %s22
      %p34 = scmp.eq.s32.totalorder %s17, 1
      %p35 = por %p33, %p34
      %p37 = scmp.ne.s32.totalorder %s22, %s36
      %p38 = scmp.eq.s32.totalorder %s17, 0
      %p39 = por %p37, %p38
      %s40 = ssub.s32 %s11, %s18
      %p41 = scmp.eq.s32.totalorder %s40, 0
      %s43 = sadd.s32 %s42, 1
      %s44 = scalar_select %p41, %s42, %s43
      %p47 = pneg %p41
      %p48 = scmp.eq.s32.totalorder %s11, 1
      %p49 = por %p47, %p48
      %p50 = scmp.ne.s32.totalorder %s42, %s45
      %p51 = scmp.eq.s32.totalorder %s11, 0
      %p52 = por %p50, %p51
      %p53 = scmp.ne.s32.totalorder %s42, %s45
      %p54 = scmp.eq.s32.totalorder %s16, 1
      %p55 = por %p53, %p54
      %p56 = scmp.ne.s32.totalorder %s45, %s46
      %p57 = scmp.eq.s32.totalorder %s16, 0
      %p58 = por %p56, %p57
      %p59 = scmp.ne.s32.totalorder %s45, %s46
      %p60 = scmp.eq.s32.totalorder %s17, 1
      %p61 = por %p59, %p60
      %p63 = scmp.ne.s32.totalorder %s46, %s62
      %p64 = scmp.eq.s32.totalorder %s17, 0
      %p65 = por %p63, %p64
      %s66 = ssub.s32 %s11, %s18
      %p67 = scmp.eq.s32.totalorder %s66, 0
      %s69 = sadd.s32 %s68, 1
      %s70 = scalar_select %p67, %s68, %s69
      %p73 = pneg %p67
      %p74 = scmp.eq.s32.totalorder %s11, 1
      %p75 = por %p73, %p74
      %p76 = scmp.ne.s32.totalorder %s68, %s71
      %p77 = scmp.eq.s32.totalorder %s11, 0
      %p78 = por %p76, %p77
      %p79 = scmp.ne.s32.totalorder %s68, %s71
      %p80 = scmp.eq.s32.totalorder %s16, 1
      %p81 = por %p79, %p80
      %p82 = scmp.ne.s32.totalorder %s71, %s72
      %p83 = scmp.eq.s32.totalorder %s16, 0
      %p84 = por %p82, %p83
      %p85 = scmp.ne.s32.totalorder %s71, %s72
      %p86 = scmp.eq.s32.totalorder %s17, 1
      %p87 = por %p85, %p86
      %p89 = scmp.ne.s32.totalorder %s72, %s88
      %p90 = scmp.eq.s32.totalorder %s17, 0
      %p91 = por %p89, %p90
      %p92 = scmp.le.s32.totalorder 1, %s11
      %p93 = scmp.lt.s32.totalorder %s11, 3
      %p94 = pnand %p92, %p93
      %p95 = pneg %p94
      // Predicated region
      $region9: #{decoder_wordembed_forward.3} parent=5 // pred_check
        _
      $region10: #{decoder_wordembed_forward.3} parent=5 // pred_check_branch
        %97 = sbr.rel (%p94) target = $region12
      $region11: #{decoder_wordembed_forward.3} parent=5 // pred_region
        %s98 = ssub.s32 %s11, 1
        // Predicated region
        $region13: #{decoder_wordembed_forward.3} parent=11 // pred_check
          %p99 = pneg %p32
        $region14: #{decoder_wordembed_forward.3} parent=11 // pred_check_branch
          %101 = sbr.rel (%p99) target = $region16
        $region15: #{decoder_wordembed_forward.3} parent=11 // pred_region
          _
        $region16: #{decoder_wordembed_forward.3} parent=11 // pred_fallthru
          _
      $region12: #{decoder_wordembed_forward.3} parent=5 // pred_fallthru
        _
      %p102 = scmp.lt.s32.totalorder %s11, 2
      // Predicated region
      $region17: #{decoder_wordembed_forward.3} parent=5 // pred_check
        %p103 = pneg %p102
      $region18: #{decoder_wordembed_forward.3} parent=5 // pred_check_branch
        %105 = sbr.rel (%p103) target = $region20
      $region19: #{decoder_wordembed_forward.3} parent=5 // pred_region
        // Predicated region
        $region21: #{decoder_wordembed_forward.3} parent=19 // pred_check
          %p106 = pneg %p52
        $region22: #{decoder_wordembed_forward.3} parent=19 // pred_check_branch
          %108 = sbr.rel (%p106) target = $region24
        $region23: #{decoder_wordembed_forward.3} parent=19 // pred_region
          %s109 = sand.u32 %s42, 1
          %s110 = sand.u32 %s42, 1
          %s111 = smul.addr %s110, 256
          %s112 = scalar_lea.vmem [#allocation2], %s111
          %s113 = smul.u32 4, %s11
          %s114 = smul.addr %s113, 4
          %s115 = scalar_lea.vmem %s1, %s114
          // Predicated region
          $region25: #{decoder_wordembed_forward.3} parent=23 // pred_check
            _
          $region26: #{decoder_wordembed_forward.3} parent=23 // pred_check_branch
            %117 = sbr.rel (0) target = $region28
          $region27: #{decoder_wordembed_forward.3} parent=23 // pred_region
            // Predicated region
            $region29: #{decoder_wordembed_forward.3} parent=27 // pred_check
              _
            $region30: #{decoder_wordembed_forward.3} parent=27 // pred_check_branch
              %119 = sbr.rel (0) target = $region32
            $region31: #{decoder_wordembed_forward.3} parent=27 // pred_region
              loop: start=0, step=1, limit=1
              $region33: #{decoder_wordembed_forward.3} parent=31 // loop_pre_header
                _
              $region34: #{decoder_wordembed_forward.3} parent=31 // loop_header
                %s121 = sphi 0, %s125
                %p122 = scmp.ge.s32.totalorder %s121, 1
                %s126 = sphi %s115, %s115
                %s127 = sphi %s112, %s112
              $region35: #{decoder_wordembed_forward.3} parent=31 // loop_header_branch
                %124 = sbr.rel (%p122) target = $region39
              $region36: #{decoder_wordembed_forward.3} parent=31 // loop_body
                %v128 = vld [vmem:[%s126] sm:$0xff]
                %129 = vst [vmem:[%s127] sm:$0xff] %v128
                %v130 = vld [vmem:[%s126 + $0x8] sm:$0xff]
                %131 = vst [vmem:[%s127 + $0x8] sm:$0xff] %v130
                %v132 = vld [vmem:[%s126 + $0x20] sm:$0xff]
                %133 = vst [vmem:[%s127 + $0x10] sm:$0xff] %v132
                %v134 = vld [vmem:[%s126 + $0x28] sm:$0xff]
                %135 = vst [vmem:[%s127 + $0x18] sm:$0xff] %v134
                %v136 = vld [vmem:[%s126 + $0x40] sm:$0xff]
                %137 = vst [vmem:[%s127 + $0x20] sm:$0xff] %v136
                %v138 = vld [vmem:[%s126 + $0x48] sm:$0xff]
                %139 = vst [vmem:[%s127 + $0x28] sm:$0xff] %v138
                %v140 = vld [vmem:[%s126 + $0x60] sm:$0xff]
                %141 = vst [vmem:[%s127 + $0x30] sm:$0xff] %v140
                %v142 = vld [vmem:[%s126 + $0x68] sm:$0xff]
                %143 = vst [vmem:[%s127 + $0x38] sm:$0xff] %v142
                %v144 = vld [vmem:[%s126 + $0x80] sm:$0xff]
                %145 = vst [vmem:[%s127 + $0x40] sm:$0xff] %v144
                %v146 = vld [vmem:[%s126 + $0x88] sm:$0xff]
                %147 = vst [vmem:[%s127 + $0x48] sm:$0xff] %v146
                %v148 = vld [vmem:[%s126 + $0xa0] sm:$0xff]
                %149 = vst [vmem:[%s127 + $0x50] sm:$0xff] %v148
                %v150 = vld [vmem:[%s126 + $0xa8] sm:$0xff]
                %151 = vst [vmem:[%s127 + $0x58] sm:$0xff] %v150
                %v152 = vld [vmem:[%s126 + $0xc0] sm:$0xff]
                %153 = vst [vmem:[%s127 + $0x60] sm:$0xff] %v152
                %v154 = vld [vmem:[%s126 + $0xc8] sm:$0xff]
                %155 = vst [vmem:[%s127 + $0x68] sm:$0xff] %v154
                %v156 = vld [vmem:[%s126 + $0xe0] sm:$0xff]
                %157 = vst [vmem:[%s127 + $0x70] sm:$0xff] %v156
                %v158 = vld [vmem:[%s126 + $0xe8] sm:$0xff]
                %159 = vst [vmem:[%s127 + $0x78] sm:$0xff] %v158
                %v160 = vld [vmem:[%s126 + $0x100] sm:$0xff]
                %161 = vst [vmem:[%s127 + $0x80] sm:$0xff] %v160
                %v162 = vld [vmem:[%s126 + $0x108] sm:$0xff]
                %163 = vst [vmem:[%s127 + $0x88] sm:$0xff] %v162
                %v164 = vld [vmem:[%s126 + $0x120] sm:$0xff]
                %165 = vst [vmem:[%s127 + $0x90] sm:$0xff] %v164
                %v166 = vld [vmem:[%s126 + $0x128] sm:$0xff]
                %167 = vst [vmem:[%s127 + $0x98] sm:$0xff] %v166
                %v168 = vld [vmem:[%s126 + $0x140] sm:$0xff]
                %169 = vst [vmem:[%s127 + $0xa0] sm:$0xff] %v168
                %v170 = vld [vmem:[%s126 + $0x148] sm:$0xff]
                %171 = vst [vmem:[%s127 + $0xa8] sm:$0xff] %v170
                %v172 = vld [vmem:[%s126 + $0x160] sm:$0xff]
                %173 = vst [vmem:[%s127 + $0xb0] sm:$0xff] %v172
                %v174 = vld [vmem:[%s126 + $0x168] sm:$0xff]
                %175 = vst [vmem:[%s127 + $0xb8] sm:$0xff] %v174
                %v176 = vld [vmem:[%s126 + $0x180] sm:$0xff]
                %177 = vst [vmem:[%s127 + $0xc0] sm:$0xff] %v176
                %v178 = vld [vmem:[%s126 + $0x188] sm:$0xff]
                %179 = vst [vmem:[%s127 + $0xc8] sm:$0xff] %v178
                %v180 = vld [vmem:[%s126 + $0x1a0] sm:$0xff]
                %181 = vst [vmem:[%s127 + $0xd0] sm:$0xff] %v180
                %v182 = vld [vmem:[%s126 + $0x1a8] sm:$0xff]
                %183 = vst [vmem:[%s127 + $0xd8] sm:$0xff] %v182
                %v184 = vld [vmem:[%s126 + $0x1c0] sm:$0xff]
                %185 = vst [vmem:[%s127 + $0xe0] sm:$0xff] %v184
                %v186 = vld [vmem:[%s126 + $0x1c8] sm:$0xff]
                %187 = vst [vmem:[%s127 + $0xe8] sm:$0xff] %v186
                %v188 = vld [vmem:[%s126 + $0x1e0] sm:$0xff]
                %189 = vst [vmem:[%s127 + $0xf0] sm:$0xff] %v188
                %v190 = vld [vmem:[%s126 + $0x1e8] sm:$0xff]
                %191 = vst [vmem:[%s127 + $0xf8] sm:$0xff] %v190
              $region37: #{decoder_wordembed_forward.3} parent=31 // loop_footer
                %s125 = sadd.s32 1, %s121
              $region38: #{decoder_wordembed_forward.3} parent=31 // loop_footer_branch
                %120 = sbr.rel target = $region34
              $region39: #{decoder_wordembed_forward.3} parent=31 // loop_exit
                _
            $region32: #{decoder_wordembed_forward.3} parent=27 // pred_fallthru
              _
            // Predicated region
            $region40: #{decoder_wordembed_forward.3} parent=27 // pred_check
              _
            $region41: #{decoder_wordembed_forward.3} parent=27 // pred_check_branch
              %193 = sbr.rel target = $region43
            $region42: #{decoder_wordembed_forward.3} parent=27 // pred_region
              _
            $region43: #{decoder_wordembed_forward.3} parent=27 // pred_fallthru
              _
          $region28: #{decoder_wordembed_forward.3} parent=23 // pred_fallthru
            _
          %194 = vnop
        $region24: #{decoder_wordembed_forward.3} parent=19 // pred_fallthru
          _
      $region20: #{decoder_wordembed_forward.3} parent=5 // pred_fallthru
        _
      %p195 = scmp.le.s32.totalorder 1, %s11
      %p196 = scmp.lt.s32.totalorder %s11, 3
      %p197 = pnand %p195, %p196
      %p198 = pneg %p197
      // Predicated region
      $region44: #{decoder_wordembed_forward.3} parent=5 // pred_check
        _
      $region45: #{decoder_wordembed_forward.3} parent=5 // pred_check_branch
        %200 = sbr.rel (%p197) target = $region47
      $region46: #{decoder_wordembed_forward.3} parent=5 // pred_region
        %s201 = ssub.s32 %s11, 1
        %s202 = sand.u32 %s45, 1
        %s203 = sand.u32 %s45, 1
        %s204 = smul.addr %s203, 256
        %s205 = scalar_lea.vmem [#allocation2], %s204
        // Predicated region
        $region48: #{decoder_wordembed_forward.3} parent=46 // pred_check
          %p206 = pneg %p58
        $region49: #{decoder_wordembed_forward.3} parent=46 // pred_check_branch
          %208 = sbr.rel (%p206) target = $region51
        $region50: #{decoder_wordembed_forward.3} parent=46 // pred_region
          _
        $region51: #{decoder_wordembed_forward.3} parent=46 // pred_fallthru
          _
        %p209 = pneg %p32
        %p210 = pneg %p29
        %s211 = sand.u32 %s45, 1
        %s212 = sand.u32 %s45, 1
        %s213 = smul.addr %s212, 256
        %s214 = scalar_lea.vmem [#allocation2], %s213
        %p215 = pneg %p58
        %p216 = pneg %p55
        %p217 = pneg %p84
        %p218 = pneg %p81
        %s219 = sand.u32 %s71, 1
        %s220 = scalar_lea.sflag [#allocation4], %s219
        %s221 = sand.u32 %s71, 1
        %s222 = smul.addr %s221, 512
        %s223 = scalar_lea.vmem [#allocation3], %s222
        %s224 = smul.u32 4, %s16
        %s225 = smul.u32 4, %s16
        %v227 = vld [vmem:[%s0] sm:$0xf]
        %v228 = vld [vmem:[%s0 + $0x4] sm:$0xf]
        %v229 = vld [vmem:[%s0 + $0x8] sm:$0xf]
        %v230 = vld [vmem:[%s0 + $0xc] sm:$0xf]
        %v231 = vld [vmem:[%s0 + $0x10] sm:$0xf]
        %v232 = vld [vmem:[%s0 + $0x14] sm:$0xf]
        %v233 = vld [vmem:[%s0 + $0x18] sm:$0xf]
        %v234 = vld [vmem:[%s0 + $0x1c] sm:$0xf]
        %v235 = vld [vmem:[%s0 + $0x20] sm:$0xf]
        %v236 = vld [vmem:[%s0 + $0x24] sm:$0xf]
        %v237 = vld [vmem:[%s0 + $0x28] sm:$0xf]
        %v238 = vld [vmem:[%s0 + $0x2c] sm:$0xf]
        %v239 = vld [vmem:[%s0 + $0x30] sm:$0xf]
        %v240 = vld [vmem:[%s0 + $0x34] sm:$0xf]
        %v241 = vld [vmem:[%s0 + $0x38] sm:$0xf]
        %v242 = vld [vmem:[%s0 + $0x3c] sm:$0xf]
        %v243 = vld [vmem:[%s205] sm:$0xff]
        %v244 = vld [vmem:[%s205 + $0x8] sm:$0xff]
        %v245 = vld [vmem:[%s205 + $0x10] sm:$0xff]
        %v246 = vld [vmem:[%s205 + $0x18] sm:$0xff]
        %v247 = vld [vmem:[%s205 + $0x20] sm:$0xff]
        %v248 = vld [vmem:[%s205 + $0x28] sm:$0xff]
        %v249 = vld [vmem:[%s205 + $0x30] sm:$0xff]
        %v250 = vld [vmem:[%s205 + $0x38] sm:$0xff]
        %v251 = vld [vmem:[%s205 + $0x40] sm:$0xff]
        %v252 = vld [vmem:[%s205 + $0x48] sm:$0xff]
        %v253 = vld [vmem:[%s205 + $0x50] sm:$0xff]
        %v254 = vld [vmem:[%s205 + $0x58] sm:$0xff]
        %v255 = vld [vmem:[%s205 + $0x60] sm:$0xff]
        %v256 = vld [vmem:[%s205 + $0x68] sm:$0xff]
        %v257 = vld [vmem:[%s205 + $0x70] sm:$0xff]
        %v258 = vld [vmem:[%s205 + $0x78] sm:$0xff]
        %v259 = vld [vmem:[%s205 + $0x80] sm:$0xff]
        %v260 = vld [vmem:[%s205 + $0x88] sm:$0xff]
        %v261 = vld [vmem:[%s205 + $0x90] sm:$0xff]
        %v262 = vld [vmem:[%s205 + $0x98] sm:$0xff]
        %v263 = vld [vmem:[%s205 + $0xa0] sm:$0xff]
        %v264 = vld [vmem:[%s205 + $0xa8] sm:$0xff]
        %v265 = vld [vmem:[%s205 + $0xb0] sm:$0xff]
        %v266 = vld [vmem:[%s205 + $0xb8] sm:$0xff]
        %v267 = vld [vmem:[%s205 + $0xc0] sm:$0xff]
        %v268 = vld [vmem:[%s205 + $0xc8] sm:$0xff]
        %v269 = vld [vmem:[%s205 + $0xd0] sm:$0xff]
        %v270 = vld [vmem:[%s205 + $0xd8] sm:$0xff]
        %v271 = vld [vmem:[%s205 + $0xe0] sm:$0xff]
        %v272 = vld [vmem:[%s205 + $0xe8] sm:$0xff]
        %v273 = vld [vmem:[%s205 + $0xf0] sm:$0xff]
        %v274 = vld [vmem:[%s205 + $0xf8] sm:$0xff]
        %v291 = vunpack.c.l.b16 %v227
        %v292 = vunpack.c.l.b16 %v228
        %v293 = vunpack.c.l.b16 %v229
        %v294 = vunpack.c.l.b16 %v230
        %v295 = vunpack.c.l.b16 %v231
        %v296 = vunpack.c.l.b16 %v232
        %v297 = vunpack.c.l.b16 %v233
        %v298 = vunpack.c.l.b16 %v234
        %v299 = vunpack.c.l.b16 %v235
        %v300 = vunpack.c.l.b16 %v236
        %v301 = vunpack.c.l.b16 %v237
        %v302 = vunpack.c.l.b16 %v238
        %v303 = vunpack.c.l.b16 %v239
        %v304 = vunpack.c.l.b16 %v240
        %v305 = vunpack.c.l.b16 %v241
        %v306 = vunpack.c.l.b16 %v242
        %v307 = vpack.c.b16 %v292, %v291
        %v308 = vpack.c.b16 %v294, %v293
        %v309 = vpack.c.b16 %v296, %v295
        %v310 = vpack.c.b16 %v298, %v297
        %v311 = vpack.c.b16 %v300, %v299
        %v312 = vpack.c.b16 %v302, %v301
        %v313 = vpack.c.b16 %v304, %v303
        %v314 = vpack.c.b16 %v306, %v305
        %v355 = vunpack.c.l.b16 %v243
        %v356 = vunpack.c.h.b16 %v243
        %v357 = vunpack.c.l.b16 %v244
        %v358 = vunpack.c.h.b16 %v244
        %v359 = vunpack.c.l.b16 %v245
        %v360 = vunpack.c.h.b16 %v245
        %v361 = vunpack.c.l.b16 %v246
        %v362 = vunpack.c.h.b16 %v246
        %v363 = vunpack.c.l.b16 %v247
        %v364 = vunpack.c.h.b16 %v247
        %v365 = vunpack.c.l.b16 %v248
        %v366 = vunpack.c.h.b16 %v248
        %v367 = vunpack.c.l.b16 %v249
        %v368 = vunpack.c.h.b16 %v249
        %v369 = vunpack.c.l.b16 %v250
        %v370 = vunpack.c.h.b16 %v250
        %v371 = vunpack.c.l.b16 %v251
        %v372 = vunpack.c.h.b16 %v251
        %v373 = vunpack.c.l.b16 %v252
        %v374 = vunpack.c.h.b16 %v252
        %v375 = vunpack.c.l.b16 %v253
        %v376 = vunpack.c.h.b16 %v253
        %v377 = vunpack.c.l.b16 %v254
        %v378 = vunpack.c.h.b16 %v254
        %v379 = vunpack.c.l.b16 %v255
        %v380 = vunpack.c.h.b16 %v255
        %v381 = vunpack.c.l.b16 %v256
        %v382 = vunpack.c.h.b16 %v256
        %v383 = vunpack.c.l.b16 %v257
        %v384 = vunpack.c.h.b16 %v257
        %v385 = vunpack.c.l.b16 %v258
        %v386 = vunpack.c.h.b16 %v258
        %v387 = vunpack.c.l.b16 %v259
        %v388 = vunpack.c.h.b16 %v259
        %v389 = vunpack.c.l.b16 %v260
        %v390 = vunpack.c.h.b16 %v260
        %v391 = vunpack.c.l.b16 %v261
        %v392 = vunpack.c.h.b16 %v261
        %v393 = vunpack.c.l.b16 %v262
        %v394 = vunpack.c.h.b16 %v262
        %v395 = vunpack.c.l.b16 %v263
        %v396 = vunpack.c.h.b16 %v263
        %v397 = vunpack.c.l.b16 %v264
        %v398 = vunpack.c.h.b16 %v264
        %v399 = vunpack.c.l.b16 %v265
        %v400 = vunpack.c.h.b16 %v265
        %v401 = vunpack.c.l.b16 %v266
        %v402 = vunpack.c.h.b16 %v266
        %v403 = vunpack.c.l.b16 %v267
        %v404 = vunpack.c.h.b16 %v267
        %v405 = vunpack.c.l.b16 %v268
        %v406 = vunpack.c.h.b16 %v268
        %v407 = vunpack.c.l.b16 %v269
        %v408 = vunpack.c.h.b16 %v269
        %v409 = vunpack.c.l.b16 %v270
        %v410 = vunpack.c.h.b16 %v270
        %v411 = vunpack.c.l.b16 %v271
        %v412 = vunpack.c.h.b16 %v271
        %v413 = vunpack.c.l.b16 %v272
        %v414 = vunpack.c.h.b16 %v272
        %v415 = vunpack.c.l.b16 %v273
        %v416 = vunpack.c.h.b16 %v273
        %v417 = vunpack.c.l.b16 %v274
        %v418 = vunpack.c.h.b16 %v274
        %v419 = vpack.c.b16 %v359, %v355
        %v420 = vpack.c.b16 %v360, %v356
        %v421 = vpack.c.b16 %v361, %v357
        %v422 = vpack.c.b16 %v362, %v358
        %v423 = vpack.c.b16 %v367, %v363
        %v424 = vpack.c.b16 %v368, %v364
        %v425 = vpack.c.b16 %v369, %v365
        %v426 = vpack.c.b16 %v370, %v366
        %v427 = vpack.c.b16 %v375, %v371
        %v428 = vpack.c.b16 %v376, %v372
        %v429 = vpack.c.b16 %v377, %v373
        %v430 = vpack.c.b16 %v378, %v374
        %v431 = vpack.c.b16 %v383, %v379
        %v432 = vpack.c.b16 %v384, %v380
        %v433 = vpack.c.b16 %v385, %v381
        %v434 = vpack.c.b16 %v386, %v382
        %v435 = vpack.c.b16 %v391, %v387
        %v436 = vpack.c.b16 %v392, %v388
        %v437 = vpack.c.b16 %v393, %v389
        %v438 = vpack.c.b16 %v394, %v390
        %v439 = vpack.c.b16 %v399, %v395
        %v440 = vpack.c.b16 %v400, %v396
        %v441 = vpack.c.b16 %v401, %v397
        %v442 = vpack.c.b16 %v402, %v398
        %v443 = vpack.c.b16 %v407, %v403
        %v444 = vpack.c.b16 %v408, %v404
        %v445 = vpack.c.b16 %v409, %v405
        %v446 = vpack.c.b16 %v410, %v406
        %v447 = vpack.c.b16 %v415, %v411
        %v448 = vpack.c.b16 %v416, %v412
        %v449 = vpack.c.b16 %v417, %v413
        %v450 = vpack.c.b16 %v418, %v414
        %483 = vmatprep.subr.bf16.mxu0 %v420
        %484 = vmatpush1.bf16.msra.mxu0 %v419
        %485 = vmatprep.subr.bf16.mxu0 %v424
        %486 = vmatpush1.bf16.msra.mxu0 %v423
        %487 = vmatprep.subr.bf16.mxu0 %v428
        %488 = vmatpush1.bf16.msra.mxu0 %v427
        %489 = vmatprep.subr.bf16.mxu0 %v432
        %490 = vmatpush1.bf16.msra.mxu0 %v431
        %491 = vmatprep.subr.bf16.mxu0 %v436
        %492 = vmatpush1.bf16.msra.mxu0 %v435
        %493 = vmatprep.subr.bf16.mxu0 %v440
        %494 = vmatpush1.bf16.msra.mxu0 %v439
        %495 = vmatprep.subr.bf16.mxu0 %v444
        %496 = vmatpush1.bf16.msra.mxu0 %v443
        %497 = vmatprep.subr.bf16.mxu0 %v448
        %498 = vmatpush1.bf16.msra.mxu0 %v447
        %499 = vmatprep.subr.bf16.mxu0 0
        %500 = vmatpush1.bf16.msra.mxu0 0
        %501 = vmatprep.subr.bf16.mxu0 0
        %502 = vmatpush1.bf16.msra.mxu0 0
        %503 = vmatprep.subr.bf16.mxu0 0
        %504 = vmatpush1.bf16.msra.mxu0 0
        %505 = vmatprep.subr.bf16.mxu0 0
        %506 = vmatpush1.bf16.msra.mxu0 0
        %507 = vmatprep.subr.bf16.mxu0 0
        %508 = vmatpush1.bf16.msra.mxu0 0
        %509 = vmatprep.subr.bf16.mxu0 0
        %510 = vmatpush1.bf16.msra.mxu0 0
        %511 = vmatprep.subr.bf16.mxu0 0
        %512 = vmatpush1.bf16.msra.mxu0 0
        %513 = vmatprep.subr.bf16.mxu0 0
        %514 = vmatpush1.bf16.msra.mxu0 0
        %515 = vmatprep.mubr.bf16.mxu0 0
        %516 = vmatmul.mubr.bf16.gmra.mrb[0].mxu0 %v307
        %v517 = vpop.f32.mrb[0].mxu0
        %v518 = vadd.f32 0.0, %v517
        %v519 = vpop.f32.mrb[0].mxu0
        %v520 = vadd.f32 0.0, %v519
        %v521 = vpop.f32.mrb[0].mxu0
        %v522 = vadd.f32 0.0, %v521
        %v523 = vpop.f32.mrb[0].mxu0
        %v524 = vadd.f32 0.0, %v523
        %525 = vmatprep.mubr.bf16.mxu0 0
        %526 = vmatmul.mubr.bf16.gmra.mrb[0].mxu0 %v308
        %v527 = vpop.f32.mrb[0].mxu0
        %v528 = vadd.f32 0.0, %v527
        %v529 = vpop.f32.mrb[0].mxu0
        %v530 = vadd.f32 0.0, %v529
        %v531 = vpop.f32.mrb[0].mxu0
        %v532 = vadd.f32 0.0, %v531
        %v533 = vpop.f32.mrb[0].mxu0
        %v534 = vadd.f32 0.0, %v533
        %535 = vmatprep.mubr.bf16.mxu0 0
        %536 = vmatmul.mubr.bf16.gmra.mrb[0].mxu0 %v309
        %v537 = vpop.f32.mrb[0].mxu0
        %v538 = vadd.f32 0.0, %v537
        %v539 = vpop.f32.mrb[0].mxu0
        %v540 = vadd.f32 0.0, %v539
        %v541 = vpop.f32.mrb[0].mxu0
        %v542 = vadd.f32 0.0, %v541
        %v543 = vpop.f32.mrb[0].mxu0
        %v544 = vadd.f32 0.0, %v543
        %545 = vmatprep.mubr.bf16.mxu0 0
        %546 = vmatmul.mubr.bf16.gmra.mrb[0].mxu0 %v310
        %v547 = vpop.f32.mrb[0].mxu0
        %v548 = vadd.f32 0.0, %v547
        %v549 = vpop.f32.mrb[0].mxu0
        %v550 = vadd.f32 0.0, %v549
        %v551 = vpop.f32.mrb[0].mxu0
        %v552 = vadd.f32 0.0, %v551
        %v553 = vpop.f32.mrb[0].mxu0
        %v554 = vadd.f32 0.0, %v553
        %555 = vmatprep.mubr.bf16.mxu0 0
        %556 = vmatmul.mubr.bf16.gmra.mrb[0].mxu0 %v311
        %v557 = vpop.f32.mrb[0].mxu0
        %v558 = vadd.f32 0.0, %v557
        %v559 = vpop.f32.mrb[0].mxu0
        %v560 = vadd.f32 0.0, %v559
        %v561 = vpop.f32.mrb[0].mxu0
        %v562 = vadd.f32 0.0, %v561
        %v563 = vpop.f32.mrb[0].mxu0
        %v564 = vadd.f32 0.0, %v563
        %565 = vmatprep.mubr.bf16.mxu0 0
        %566 = vmatmul.mubr.bf16.gmra.mrb[0].mxu0 %v312
        %v567 = vpop.f32.mrb[0].mxu0
        %v568 = vadd.f32 0.0, %v567
        %v569 = vpop.f32.mrb[0].mxu0
        %v570 = vadd.f32 0.0, %v569
        %v571 = vpop.f32.mrb[0].mxu0
        %v572 = vadd.f32 0.0, %v571
        %v573 = vpop.f32.mrb[0].mxu0
        %v574 = vadd.f32 0.0, %v573
        %575 = vmatprep.mubr.bf16.mxu0 0
        %576 = vmatmul.mubr.bf16.gmra.mrb[0].mxu0 %v313
        %v577 = vpop.f32.mrb[0].mxu0
        %v578 = vadd.f32 0.0, %v577
        %v579 = vpop.f32.mrb[0].mxu0
        %v580 = vadd.f32 0.0, %v579
        %v581 = vpop.f32.mrb[0].mxu0
        %v582 = vadd.f32 0.0, %v581
        %v583 = vpop.f32.mrb[0].mxu0
        %v584 = vadd.f32 0.0, %v583
        %585 = vmatprep.mubr.bf16.mxu0 0
        %586 = vmatmul.mubr.bf16.gmra.mrb[0].mxu0 %v314
        %v587 = vpop.f32.mrb[0].mxu0
        %v588 = vadd.f32 0.0, %v587
        %v589 = vpop.f32.mrb[0].mxu0
        %v590 = vadd.f32 0.0, %v589
        %v591 = vpop.f32.mrb[0].mxu0
        %v592 = vadd.f32 0.0, %v591
        %v593 = vpop.f32.mrb[0].mxu0
        %v594 = vadd.f32 0.0, %v593
        %595 = vdwg.mxu0
        %596 = vmatprep.subr.bf16.mxu0 %v422
        %597 = vmatpush1.bf16.msra.mxu0 %v421
        %598 = vmatprep.subr.bf16.mxu0 %v426
        %599 = vmatpush1.bf16.msra.mxu0 %v425
        %600 = vmatprep.subr.bf16.mxu0 %v430
        %601 = vmatpush1.bf16.msra.mxu0 %v429
        %602 = vmatprep.subr.bf16.mxu0 %v434
        %603 = vmatpush1.bf16.msra.mxu0 %v433
        %604 = vmatprep.subr.bf16.mxu0 %v438
        %605 = vmatpush1.bf16.msra.mxu0 %v437
        %606 = vmatprep.subr.bf16.mxu0 %v442
        %607 = vmatpush1.bf16.msra.mxu0 %v441
        %608 = vmatprep.subr.bf16.mxu0 %v446
        %609 = vmatpush1.bf16.msra.mxu0 %v445
        %610 = vmatprep.subr.bf16.mxu0 %v450
        %611 = vmatpush1.bf16.msra.mxu0 %v449
        %612 = vmatprep.subr.bf16.mxu0 0
        %613 = vmatpush1.bf16.msra.mxu0 0
        %614 = vmatprep.subr.bf16.mxu0 0
        %615 = vmatpush1.bf16.msra.mxu0 0
        %616 = vmatprep.subr.bf16.mxu0 0
        %617 = vmatpush1.bf16.msra.mxu0 0
        %618 = vmatprep.subr.bf16.mxu0 0
        %619 = vmatpush1.bf16.msra.mxu0 0
        %620 = vmatprep.subr.bf16.mxu0 0
        %621 = vmatpush1.bf16.msra.mxu0 0
        %622 = vmatprep.subr.bf16.mxu0 0
        %623 = vmatpush1.bf16.msra.mxu0 0
        %624 = vmatprep.subr.bf16.mxu0 0
        %625 = vmatpush1.bf16.msra.mxu0 0
        %626 = vmatprep.subr.bf16.mxu0 0
        %627 = vmatpush1.bf16.msra.mxu0 0
        %628 = vmatprep.mubr.bf16.mxu0 0
        %629 = vmatmul.mubr.bf16.gmra.mrb[0].mxu0 %v307
        %v630 = vpop.f32.mrb[0].mxu0
        %v631 = vadd.f32 0.0, %v630
        %v632 = vpop.f32.mrb[0].mxu0
        %v633 = vadd.f32 0.0, %v632
        %v634 = vpop.f32.mrb[0].mxu0
        %v635 = vadd.f32 0.0, %v634
        %v636 = vpop.f32.mrb[0].mxu0
        %v637 = vadd.f32 0.0, %v636
        %638 = vmatprep.mubr.bf16.mxu0 0
        %639 = vmatmul.mubr.bf16.gmra.mrb[0].mxu0 %v308
        %v640 = vpop.f32.mrb[0].mxu0
        %v641 = vadd.f32 0.0, %v640
        %v642 = vpop.f32.mrb[0].mxu0
        %v643 = vadd.f32 0.0, %v642
        %v644 = vpop.f32.mrb[0].mxu0
        %v645 = vadd.f32 0.0, %v644
        %v646 = vpop.f32.mrb[0].mxu0
        %v647 = vadd.f32 0.0, %v646
        %648 = vmatprep.mubr.bf16.mxu0 0
        %649 = vmatmul.mubr.bf16.gmra.mrb[0].mxu0 %v309
        %v650 = vpop.f32.mrb[0].mxu0
        %v651 = vadd.f32 0.0, %v650
        %v652 = vpop.f32.mrb[0].mxu0
        %v653 = vadd.f32 0.0, %v652
        %v654 = vpop.f32.mrb[0].mxu0
        %v655 = vadd.f32 0.0, %v654
        %v656 = vpop.f32.mrb[0].mxu0
        %v657 = vadd.f32 0.0, %v656
        %658 = vmatprep.mubr.bf16.mxu0 0
        %659 = vmatmul.mubr.bf16.gmra.mrb[0].mxu0 %v310
        %v660 = vpop.f32.mrb[0].mxu0
        %v661 = vadd.f32 0.0, %v660
        %v662 = vpop.f32.mrb[0].mxu0
        %v663 = vadd.f32 0.0, %v662
        %v664 = vpop.f32.mrb[0].mxu0
        %v665 = vadd.f32 0.0, %v664
        %v666 = vpop.f32.mrb[0].mxu0
        %v667 = vadd.f32 0.0, %v666
        %668 = vmatprep.mubr.bf16.mxu0 0
        %669 = vmatmul.mubr.bf16.gmra.mrb[0].mxu0 %v311
        %v670 = vpop.f32.mrb[0].mxu0
        %v671 = vadd.f32 0.0, %v670
        %v672 = vpop.f32.mrb[0].mxu0
        %v673 = vadd.f32 0.0, %v672
        %v674 = vpop.f32.mrb[0].mxu0
        %v675 = vadd.f32 0.0, %v674
        %v676 = vpop.f32.mrb[0].mxu0
        %v677 = vadd.f32 0.0, %v676
        %678 = vmatprep.mubr.bf16.mxu0 0
        %679 = vmatmul.mubr.bf16.gmra.mrb[0].mxu0 %v312
        %v680 = vpop.f32.mrb[0].mxu0
        %v681 = vadd.f32 0.0, %v680
        %v682 = vpop.f32.mrb[0].mxu0
        %v683 = vadd.f32 0.0, %v682
        %v684 = vpop.f32.mrb[0].mxu0
        %v685 = vadd.f32 0.0, %v684
        %v686 = vpop.f32.mrb[0].mxu0
        %v687 = vadd.f32 0.0, %v686
        %688 = vmatprep.mubr.bf16.mxu0 0
        %689 = vmatmul.mubr.bf16.gmra.mrb[0].mxu0 %v313
        %v690 = vpop.f32.mrb[0].mxu0
        %v691 = vadd.f32 0.0, %v690
        %v692 = vpop.f32.mrb[0].mxu0
        %v693 = vadd.f32 0.0, %v692
        %v694 = vpop.f32.mrb[0].mxu0
        %v695 = vadd.f32 0.0, %v694
        %v696 = vpop.f32.mrb[0].mxu0
        %v697 = vadd.f32 0.0, %v696
        %698 = vmatprep.mubr.bf16.mxu0 0
        %699 = vmatmul.mubr.bf16.gmra.mrb[0].mxu0 %v314
        %v700 = vpop.f32.mrb[0].mxu0
        %v701 = vadd.f32 0.0, %v700
        %v702 = vpop.f32.mrb[0].mxu0
        %v703 = vadd.f32 0.0, %v702
        %v704 = vpop.f32.mrb[0].mxu0
        %v705 = vadd.f32 0.0, %v704
        %v706 = vpop.f32.mrb[0].mxu0
        %v707 = vadd.f32 0.0, %v706
        %708 = vdwg.mxu0
        %v709 = vmul.f32 %v518, 0.5
        %v710 = vmul.f32 %v520, 0.5
        %v711 = vmul.f32 %v631, 0.5
        %v712 = vmul.f32 %v633, 0.5
        %v713 = vmul.f32 %v522, 0.5
        %v714 = vmul.f32 %v524, 0.5
        %v715 = vmul.f32 %v635, 0.5
        %v716 = vmul.f32 %v637, 0.5
        %v717 = vmul.f32 %v528, 0.5
        %v718 = vmul.f32 %v530, 0.5
        %v719 = vmul.f32 %v641, 0.5
        %v720 = vmul.f32 %v643, 0.5
        %v721 = vmul.f32 %v532, 0.5
        %v722 = vmul.f32 %v534, 0.5
        %v723 = vmul.f32 %v645, 0.5
        %v724 = vmul.f32 %v647, 0.5
        %v725 = vmul.f32 %v538, 0.5
        %v726 = vmul.f32 %v540, 0.5
        %v727 = vmul.f32 %v651, 0.5
        %v728 = vmul.f32 %v653, 0.5
        %v729 = vmul.f32 %v542, 0.5
        %v730 = vmul.f32 %v544, 0.5
        %v731 = vmul.f32 %v655, 0.5
        %v732 = vmul.f32 %v657, 0.5
        %v733 = vmul.f32 %v548, 0.5
        %v734 = vmul.f32 %v550, 0.5
        %v735 = vmul.f32 %v661, 0.5
        %v736 = vmul.f32 %v663, 0.5
        %v737 = vmul.f32 %v552, 0.5
        %v738 = vmul.f32 %v554, 0.5
        %v739 = vmul.f32 %v665, 0.5
        %v740 = vmul.f32 %v667, 0.5
        %v741 = vmul.f32 %v558, 0.5
        %v742 = vmul.f32 %v560, 0.5
        %v743 = vmul.f32 %v671, 0.5
        %v744 = vmul.f32 %v673, 0.5
        %v745 = vmul.f32 %v562, 0.5
        %v746 = vmul.f32 %v564, 0.5
        %v747 = vmul.f32 %v675, 0.5
        %v748 = vmul.f32 %v677, 0.5
        %v749 = vmul.f32 %v568, 0.5
        %v750 = vmul.f32 %v570, 0.5
        %v751 = vmul.f32 %v681, 0.5
        %v752 = vmul.f32 %v683, 0.5
        %v753 = vmul.f32 %v572, 0.5
        %v754 = vmul.f32 %v574, 0.5
        %v755 = vmul.f32 %v685, 0.5
        %v756 = vmul.f32 %v687, 0.5
        %v757 = vmul.f32 %v578, 0.5
        %v758 = vmul.f32 %v580, 0.5
        %v759 = vmul.f32 %v691, 0.5
        %v760 = vmul.f32 %v693, 0.5
        %v761 = vmul.f32 %v582, 0.5
        %v762 = vmul.f32 %v584, 0.5
        %v763 = vmul.f32 %v695, 0.5
        %v764 = vmul.f32 %v697, 0.5
        %v765 = vmul.f32 %v588, 0.5
        %v766 = vmul.f32 %v590, 0.5
        %v767 = vmul.f32 %v701, 0.5
        %v768 = vmul.f32 %v703, 0.5
        %v769 = vmul.f32 %v592, 0.5
        %v770 = vmul.f32 %v594, 0.5
        %v771 = vmul.f32 %v705, 0.5
        %v772 = vmul.f32 %v707, 0.5
        %v773 = vtanh.pop %v709
        %v774 = vtanh.pop %v710
        %v775 = vtanh.pop %v711
        %v776 = vtanh.pop %v712
        %v777 = vtanh.pop %v713
        %v778 = vtanh.pop %v714
        %v779 = vtanh.pop %v715
        %v780 = vtanh.pop %v716
        %v781 = vtanh.pop %v717
        %v782 = vtanh.pop %v718
        %v783 = vtanh.pop %v719
        %v784 = vtanh.pop %v720
        %v785 = vtanh.pop %v721
        %v786 = vtanh.pop %v722
        %v787 = vtanh.pop %v723
        %v788 = vtanh.pop %v724
        %v789 = vtanh.pop %v725
        %v790 = vtanh.pop %v726
        %v791 = vtanh.pop %v727
        %v792 = vtanh.pop %v728
        %v793 = vtanh.pop %v729
        %v794 = vtanh.pop %v730
        %v795 = vtanh.pop %v731
        %v796 = vtanh.pop %v732
        %v797 = vtanh.pop %v733
        %v798 = vtanh.pop %v734
        %v799 = vtanh.pop %v735
        %v800 = vtanh.pop %v736
        %v801 = vtanh.pop %v737
        %v802 = vtanh.pop %v738
        %v803 = vtanh.pop %v739
        %v804 = vtanh.pop %v740
        %v805 = vtanh.pop %v741
        %v806 = vtanh.pop %v742
        %v807 = vtanh.pop %v743
        %v808 = vtanh.pop %v744
        %v809 = vtanh.pop %v745
        %v810 = vtanh.pop %v746
        %v811 = vtanh.pop %v747
        %v812 = vtanh.pop %v748
        %v813 = vtanh.pop %v749
        %v814 = vtanh.pop %v750
        %v815 = vtanh.pop %v751
        %v816 = vtanh.pop %v752
        %v817 = vtanh.pop %v753
        %v818 = vtanh.pop %v754
        %v819 = vtanh.pop %v755
        %v820 = vtanh.pop %v756
        %v821 = vtanh.pop %v757
        %v822 = vtanh.pop %v758
        %v823 = vtanh.pop %v759
        %v824 = vtanh.pop %v760
        %v825 = vtanh.pop %v761
        %v826 = vtanh.pop %v762
        %v827 = vtanh.pop %v763
        %v828 = vtanh.pop %v764
        %v829 = vtanh.pop %v765
        %v830 = vtanh.pop %v766
        %v831 = vtanh.pop %v767
        %v832 = vtanh.pop %v768
        %v833 = vtanh.pop %v769
        %v834 = vtanh.pop %v770
        %v835 = vtanh.pop %v771
        %v836 = vtanh.pop %v772
        %v837 = vmul.f32 %v773, 0.5
        %v838 = vmul.f32 %v774, 0.5
        %v839 = vmul.f32 %v775, 0.5
        %v840 = vmul.f32 %v776, 0.5
        %v841 = vmul.f32 %v777, 0.5
        %v842 = vmul.f32 %v778, 0.5
        %v843 = vmul.f32 %v779, 0.5
        %v844 = vmul.f32 %v780, 0.5
        %v845 = vmul.f32 %v781, 0.5
        %v846 = vmul.f32 %v782, 0.5
        %v847 = vmul.f32 %v783, 0.5
        %v848 = vmul.f32 %v784, 0.5
        %v849 = vmul.f32 %v785, 0.5
        %v850 = vmul.f32 %v786, 0.5
        %v851 = vmul.f32 %v787, 0.5
        %v852 = vmul.f32 %v788, 0.5
        %v853 = vmul.f32 %v789, 0.5
        %v854 = vmul.f32 %v790, 0.5
        %v855 = vmul.f32 %v791, 0.5
        %v856 = vmul.f32 %v792, 0.5
        %v857 = vmul.f32 %v793, 0.5
        %v858 = vmul.f32 %v794, 0.5
        %v859 = vmul.f32 %v795, 0.5
        %v860 = vmul.f32 %v796, 0.5
        %v861 = vmul.f32 %v797, 0.5
        %v862 = vmul.f32 %v798, 0.5
        %v863 = vmul.f32 %v799, 0.5
        %v864 = vmul.f32 %v800, 0.5
        %v865 = vmul.f32 %v801, 0.5
        %v866 = vmul.f32 %v802, 0.5
        %v867 = vmul.f32 %v803, 0.5
        %v868 = vmul.f32 %v804, 0.5
        %v869 = vmul.f32 %v805, 0.5
        %v870 = vmul.f32 %v806, 0.5
        %v871 = vmul.f32 %v807, 0.5
        %v872 = vmul.f32 %v808, 0.5
        %v873 = vmul.f32 %v809, 0.5
        %v874 = vmul.f32 %v810, 0.5
        %v875 = vmul.f32 %v811, 0.5
        %v876 = vmul.f32 %v812, 0.5
        %v877 = vmul.f32 %v813, 0.5
        %v878 = vmul.f32 %v814, 0.5
        %v879 = vmul.f32 %v815, 0.5
        %v880 = vmul.f32 %v816, 0.5
        %v881 = vmul.f32 %v817, 0.5
        %v882 = vmul.f32 %v818, 0.5
        %v883 = vmul.f32 %v819, 0.5
        %v884 = vmul.f32 %v820, 0.5
        %v885 = vmul.f32 %v821, 0.5
        %v886 = vmul.f32 %v822, 0.5
        %v887 = vmul.f32 %v823, 0.5
        %v888 = vmul.f32 %v824, 0.5
        %v889 = vmul.f32 %v825, 0.5
        %v890 = vmul.f32 %v826, 0.5
        %v891 = vmul.f32 %v827, 0.5
        %v892 = vmul.f32 %v828, 0.5
        %v893 = vmul.f32 %v829, 0.5
        %v894 = vmul.f32 %v830, 0.5
        %v895 = vmul.f32 %v831, 0.5
        %v896 = vmul.f32 %v832, 0.5
        %v897 = vmul.f32 %v833, 0.5
        %v898 = vmul.f32 %v834, 0.5
        %v899 = vmul.f32 %v835, 0.5
        %v900 = vmul.f32 %v836, 0.5
        %v901 = vadd.f32 %v837, 0.5
        %v902 = vadd.f32 %v838, 0.5
        %v903 = vadd.f32 %v839, 0.5
        %v904 = vadd.f32 %v840, 0.5
        %v905 = vadd.f32 %v841, 0.5
        %v906 = vadd.f32 %v842, 0.5
        %v907 = vadd.f32 %v843, 0.5
        %v908 = vadd.f32 %v844, 0.5
        %v909 = vadd.f32 %v845, 0.5
        %v910 = vadd.f32 %v846, 0.5
        %v911 = vadd.f32 %v847, 0.5
        %v912 = vadd.f32 %v848, 0.5
        %v913 = vadd.f32 %v849, 0.5
        %v914 = vadd.f32 %v850, 0.5
        %v915 = vadd.f32 %v851, 0.5
        %v916 = vadd.f32 %v852, 0.5
        %v917 = vadd.f32 %v853, 0.5
        %v918 = vadd.f32 %v854, 0.5
        %v919 = vadd.f32 %v855, 0.5
        %v920 = vadd.f32 %v856, 0.5
        %v921 = vadd.f32 %v857, 0.5
        %v922 = vadd.f32 %v858, 0.5
        %v923 = vadd.f32 %v859, 0.5
        %v924 = vadd.f32 %v860, 0.5
        %v925 = vadd.f32 %v861, 0.5
        %v926 = vadd.f32 %v862, 0.5
        %v927 = vadd.f32 %v863, 0.5
        %v928 = vadd.f32 %v864, 0.5
        %v929 = vadd.f32 %v865, 0.5
        %v930 = vadd.f32 %v866, 0.5
        %v931 = vadd.f32 %v867, 0.5
        %v932 = vadd.f32 %v868, 0.5
        %v933 = vadd.f32 %v869, 0.5
        %v934 = vadd.f32 %v870, 0.5
        %v935 = vadd.f32 %v871, 0.5
        %v936 = vadd.f32 %v872, 0.5
        %v937 = vadd.f32 %v873, 0.5
        %v938 = vadd.f32 %v874, 0.5
        %v939 = vadd.f32 %v875, 0.5
        %v940 = vadd.f32 %v876, 0.5
        %v941 = vadd.f32 %v877, 0.5
        %v942 = vadd.f32 %v878, 0.5
        %v943 = vadd.f32 %v879, 0.5
        %v944 = vadd.f32 %v880, 0.5
        %v945 = vadd.f32 %v881, 0.5
        %v946 = vadd.f32 %v882, 0.5
        %v947 = vadd.f32 %v883, 0.5
        %v948 = vadd.f32 %v884, 0.5
        %v949 = vadd.f32 %v885, 0.5
        %v950 = vadd.f32 %v886, 0.5
        %v951 = vadd.f32 %v887, 0.5
        %v952 = vadd.f32 %v888, 0.5
        %v953 = vadd.f32 %v889, 0.5
        %v954 = vadd.f32 %v890, 0.5
        %v955 = vadd.f32 %v891, 0.5
        %v956 = vadd.f32 %v892, 0.5
        %v957 = vadd.f32 %v893, 0.5
        %v958 = vadd.f32 %v894, 0.5
        %v959 = vadd.f32 %v895, 0.5
        %v960 = vadd.f32 %v896, 0.5
        %v961 = vadd.f32 %v897, 0.5
        %v962 = vadd.f32 %v898, 0.5
        %v963 = vadd.f32 %v899, 0.5
        %v964 = vadd.f32 %v900, 0.5
        %965 = vst [vmem:[%s223] sm:$0xff] %v901
        %966 = vst [vmem:[%s223 + $0x8] sm:$0xff] %v902
        %967 = vst [vmem:[%s223 + $0x10] sm:$0xff] %v903
        %968 = vst [vmem:[%s223 + $0x18] sm:$0xff] %v904
        %969 = vst [vmem:[%s223 + $0x20] sm:$0xff] %v905
        %970 = vst [vmem:[%s223 + $0x28] sm:$0xff] %v906
        %971 = vst [vmem:[%s223 + $0x30] sm:$0xff] %v907
        %972 = vst [vmem:[%s223 + $0x38] sm:$0xff] %v908
        %973 = vst [vmem:[%s223 + $0x40] sm:$0xff] %v909
        %974 = vst [vmem:[%s223 + $0x48] sm:$0xff] %v910
        %975 = vst [vmem:[%s223 + $0x50] sm:$0xff] %v911
        %976 = vst [vmem:[%s223 + $0x58] sm:$0xff] %v912
        %977 = vst [vmem:[%s223 + $0x60] sm:$0xff] %v913
        %978 = vst [vmem:[%s223 + $0x68] sm:$0xff] %v914
        %979 = vst [vmem:[%s223 + $0x70] sm:$0xff] %v915
        %980 = vst [vmem:[%s223 + $0x78] sm:$0xff] %v916
        %981 = vst [vmem:[%s223 + $0x80] sm:$0xff] %v917
        %982 = vst [vmem:[%s223 + $0x88] sm:$0xff] %v918
        %983 = vst [vmem:[%s223 + $0x90] sm:$0xff] %v919
        %984 = vst [vmem:[%s223 + $0x98] sm:$0xff] %v920
        %985 = vst [vmem:[%s223 + $0xa0] sm:$0xff] %v921
        %986 = vst [vmem:[%s223 + $0xa8] sm:$0xff] %v922
        %987 = vst [vmem:[%s223 + $0xb0] sm:$0xff] %v923
        %988 = vst [vmem:[%s223 + $0xb8] sm:$0xff] %v924
        %989 = vst [vmem:[%s223 + $0xc0] sm:$0xff] %v925
        %990 = vst [vmem:[%s223 + $0xc8] sm:$0xff] %v926
        %991 = vst [vmem:[%s223 + $0xd0] sm:$0xff] %v927
        %992 = vst [vmem:[%s223 + $0xd8] sm:$0xff] %v928
        %993 = vst [vmem:[%s223 + $0xe0] sm:$0xff] %v929
        %994 = vst [vmem:[%s223 + $0xe8] sm:$0xff] %v930
        %995 = vst [vmem:[%s223 + $0xf0] sm:$0xff] %v931
        %996 = vst [vmem:[%s223 + $0xf8] sm:$0xff] %v932
        %997 = vst [vmem:[%s223 + $0x100] sm:$0xff] %v933
        %998 = vst [vmem:[%s223 + $0x108] sm:$0xff] %v934
        %999 = vst [vmem:[%s223 + $0x110] sm:$0xff] %v935
        %1000 = vst [vmem:[%s223 + $0x118] sm:$0xff] %v936
        %1001 = vst [vmem:[%s223 + $0x120] sm:$0xff] %v937
        %1002 = vst [vmem:[%s223 + $0x128] sm:$0xff] %v938
        %1003 = vst [vmem:[%s223 + $0x130] sm:$0xff] %v939
        %1004 = vst [vmem:[%s223 + $0x138] sm:$0xff] %v940
        %1005 = vst [vmem:[%s223 + $0x140] sm:$0xff] %v941
        %1006 = vst [vmem:[%s223 + $0x148] sm:$0xff] %v942
        %1007 = vst [vmem:[%s223 + $0x150] sm:$0xff] %v943
        %1008 = vst [vmem:[%s223 + $0x158] sm:$0xff] %v944
        %1009 = vst [vmem:[%s223 + $0x160] sm:$0xff] %v945
        %1010 = vst [vmem:[%s223 + $0x168] sm:$0xff] %v946
        %1011 = vst [vmem:[%s223 + $0x170] sm:$0xff] %v947
        %1012 = vst [vmem:[%s223 + $0x178] sm:$0xff] %v948
        %1013 = vst [vmem:[%s223 + $0x180] sm:$0xff] %v949
        %1014 = vst [vmem:[%s223 + $0x188] sm:$0xff] %v950
        %1015 = vst [vmem:[%s223 + $0x190] sm:$0xff] %v951
        %1016 = vst [vmem:[%s223 + $0x198] sm:$0xff] %v952
        %1017 = vst [vmem:[%s223 + $0x1a0] sm:$0xff] %v953
        %1018 = vst [vmem:[%s223 + $0x1a8] sm:$0xff] %v954
        %1019 = vst [vmem:[%s223 + $0x1b0] sm:$0xff] %v955
        %1020 = vst [vmem:[%s223 + $0x1b8] sm:$0xff] %v956
        %1021 = vst [vmem:[%s223 + $0x1c0] sm:$0xff] %v957
        %1022 = vst [vmem:[%s223 + $0x1c8] sm:$0xff] %v958
        %1023 = vst [vmem:[%s223 + $0x1d0] sm:$0xff] %v959
        %1024 = vst [vmem:[%s223 + $0x1d8] sm:$0xff] %v960
        %1025 = vst [vmem:[%s223 + $0x1e0] sm:$0xff] %v961
        %1026 = vst [vmem:[%s223 + $0x1e8] sm:$0xff] %v962
        %1027 = vst [vmem:[%s223 + $0x1f0] sm:$0xff] %v963
        %1028 = vst [vmem:[%s223 + $0x1f8] sm:$0xff] %v964
        %s1029 = sand.u32 %s71, 1
        %s1030 = scalar_lea.sflag [#allocation4], %s1029
        %s1031 = sand.u32 %s71, 1
        %s1032 = smul.addr %s1031, 512
        %s1033 = scalar_lea.vmem [#allocation3], %s1032
        // Predicated region
        $region52: #{decoder_wordembed_forward.3} parent=46 // pred_check
          %p1034 = pneg %p81
        $region53: #{decoder_wordembed_forward.3} parent=46 // pred_check_branch
          %1036 = sbr.rel (%p1034) target = $region55
        $region54: #{decoder_wordembed_forward.3} parent=46 // pred_region
          %s1037 = smul.u32 4, %s16
          %s1039 = ssub.s32 8192, 8192
          %1040 = vsyncadd %s1030, %s1039
          %s1041 = smul.addr %s1037, 128
          %s1042 = scalar_lea.hbm %s2, %s1041
          %s1043 = sshll.u32 %s1033, 4
          %s1044 = int_to_ptr.vmem [resolvable:$true] %s1043
          %1049 = dma.vmem_to_hbm [thread:$0]  %s1044, 8192, %s1042, %s1030, 512, 1024, 32
        $region55: #{decoder_wordembed_forward.3} parent=46 // pred_fallthru
          _
      $region47: #{decoder_wordembed_forward.3} parent=5 // pred_fallthru
        _
      %p1050 = scmp.le.s32.totalorder 2, %s11
      // Predicated region
      $region56: #{decoder_wordembed_forward.3} parent=5 // pred_check
        %p1051 = pneg %p1050
      $region57: #{decoder_wordembed_forward.3} parent=5 // pred_check_branch
        %1053 = sbr.rel (%p1051) target = $region59
      $region58: #{decoder_wordembed_forward.3} parent=5 // pred_region
        %s1054 = ssub.s32 %s11, 2
        // Predicated region
        $region60: #{decoder_wordembed_forward.3} parent=58 // pred_check
          %p1055 = pneg %p87
        $region61: #{decoder_wordembed_forward.3} parent=58 // pred_check_branch
          %1057 = sbr.rel (%p1055) target = $region63
        $region62: #{decoder_wordembed_forward.3} parent=58 // pred_region
          %s1058 = sand.u32 %s72, 1
          %s1059 = scalar_lea.sflag [#allocation4], %s1058
          %s1060 = sand.u32 %s72, 1
          %s1061 = smul.addr %s1060, 512
          %s1062 = scalar_lea.vmem [#allocation3], %s1061
          %1063 = dma.done %s1059, 8192
        $region63: #{decoder_wordembed_forward.3} parent=58 // pred_fallthru
          _
      $region59: #{decoder_wordembed_forward.3} parent=5 // pred_fallthru
        _
    $region6: #{decoder_wordembed_forward.3} parent=1 // loop_footer
      %s15 = sadd.s32 1, %s11
    $region7: #{decoder_wordembed_forward.3} parent=1 // loop_footer_branch
      %10 = sbr.rel target = $region3
    $region8: #{decoder_wordembed_forward.3} parent=1 // loop_exit
      _
    %1064 = vsyncpa [#allocation4], 1
    %s1065 = scalar_lea.sflag [#allocation4], 1
    %1066 = vsyncpa %s1065, 1

</llo_original>
